<compile_context>
chip_gen: v7x
topology: tpu7x:2x2x1
jax: 0.10.0
libtpu: 0.0.40
codegen_flags: <defaults>
</compile_context>

<pallas_src>
import math
import functools

import jax
import jax.numpy as jnp
from jax.experimental import pallas as pl
from jax.experimental.pallas import tpu as pltpu


def _mha_kernel(q_ref, k_ref, v_ref,
                wqkv_ref, bqkv_ref, wo_ref, bo_ref,
                o_ref,
                kh_ref, vh_ref,
                *, heads, d_k):
    """One (batch, query-tile) grid step.

    q_ref          (1, tq, D)  bf16
    k_ref, v_ref   (1, S,  D)  bf16  (full sequence of this batch element)
    wqkv_ref       (3, D, D)   bf16  [0]=Wq * 1/sqrt(d_k), [1]=Wk, [2]=Wv
    bqkv_ref       (3, 1, D)   f32   [0]=bq * 1/sqrt(d_k), [1]=bk, [2]=bv
    wo_ref         (D, D)      bf16
    bo_ref         (1, D)      f32
    o_ref          (1, tq, D)  f32 output
    kh_ref, vh_ref (S, D)      bf16 VMEM scratch: cached, head-concatenated
                               (lane-dense) K / V projections.
    """
    H, dk = heads, d_k
    qi = pl.program_id(1)
    tq = q_ref.shape[1]
    S = k_ref.shape[1]
    D = q_ref.shape[2]

    # ---- K / V projections: one full-width (S,D)@(D,D) MXU matmul each,
    #      computed once per batch element (first query tile) and cached
    #      lane-dense in bf16 VMEM scratch for all query tiles of this batch.
    #      INVARIANT: this is only correct because the query-tile grid axis is
    #      "arbitrary" (sequential on one core). Do not mark it "parallel"
    #      (e.g. for v7x's 2 TCs) without removing this caching.
    @pl.when(qi == 0)
    def _():
        kp = jnp.dot(k_ref[0], wqkv_ref[1],
                     preferred_element_type=jnp.float32) + bqkv_ref[1]
        vp = jnp.dot(v_ref[0], wqkv_ref[2],
                     preferred_element_type=jnp.float32) + bqkv_ref[2]
        kh_ref[...] = kp.astype(jnp.bfloat16)
        vh_ref[...] = vp.astype(jnp.bfloat16)

    # ---- Q projection for this tile: single full-width matmul. The
    #      1/sqrt(d_k) softmax scale is pre-folded into Wq / bq on the host.
    qp = jnp.dot(q_ref[0], wqkv_ref[0],
                 preferred_element_type=jnp.float32) + bqkv_ref[0]       # (tq,D) f32

    # ---- split heads only for the attention einsums (reshape + XLU transpose).
    qh = jnp.transpose(qp.reshape(tq, H, dk), (1, 0, 2)).astype(jnp.bfloat16)  # (H,tq,dk)
    kh = jnp.transpose(kh_ref[...].reshape(S, H, dk), (1, 0, 2))               # (H,S,dk) bf16
    vh = jnp.transpose(vh_ref[...].reshape(S, H, dk), (1, 0, 2))               # (H,S,dk) bf16

    # ---- scores and numerically-stable softmax over keys (f32 accumulation).
    scores = jnp.einsum('hqd,hkd->hqk', qh, kh,
                        preferred_element_type=jnp.float32)              # (H,tq,S)
    m = jnp.max(scores, axis=-1, keepdims=True)
    e = jnp.exp(scores - m)
    denom = jnp.sum(e, axis=-1, keepdims=True)
    p = e * pl.reciprocal(denom, approx=True)            # EUP reciprocal (free slot)
    # TODO(synk): mask != None (masked_fill) and attention dropout (train mode).

    # ---- per-head context, then head-concat back to (tq, D) and ONE
    #      full-width output projection (contraction depth K = D).
    ctx = jnp.einsum('hqk,hkd->hqd', p.astype(jnp.bfloat16), vh,
                     preferred_element_type=jnp.float32)                 # (H,tq,dk)
    ctx_cat = jnp.transpose(ctx, (1, 0, 2)).reshape(tq, D).astype(jnp.bfloat16)
    out = jnp.dot(ctx_cat, wo_ref[...],
                  preferred_element_type=jnp.float32) + bo_ref[...]      # (tq,D)
    o_ref[0] = out.astype(o_ref.dtype)


def _vmem_bytes_estimate(S, D, heads, q_tile):
    """Rough VMEM budget: double-buffered pipeline blocks + scratch + temps."""
    bf16, f32 = 2, 4
    dbl = 2  # pipeline double buffering
    buf = (dbl * q_tile * D * bf16            # q block
           + 2 * dbl * S * D * bf16           # k, v blocks
           + dbl * 3 * D * D * bf16           # wqkv
           + dbl * 3 * D * f32                # bqkv
           + dbl * D * D * bf16               # wo
           + dbl * D * f32                    # bo
           + dbl * q_tile * D * f32           # output block
           + 2 * S * D * bf16)                # kh / vh scratch
    # softmax / projection temporaries (scores, e, p + bf16 copies, qp, ctx...)
    tmp = (4 * heads * q_tile * S * f32
           + 3 * S * D * f32
           + 4 * q_tile * D * f32)
    return buf + tmp


def multi_head_attention(q, k, v, params, *, heads, q_tile=None):
    """Multi-head attention forward (mask=None, eval mode).

    q, k, v: (B, S, D) float32.  params: dict from init_params (weights stored
    pre-transposed, y = x @ W + b).
    """
    B, S, D = q.shape
    assert D % heads == 0, "d_model must be divisible by heads"
    d_k = D // heads
    out_dtype = q.dtype

    # Query tile: largest divisor of S that is a multiple of 8 (sublane
    # granularity), capped at 256 (keeps the (H, tq, S) softmax temporaries and
    # score tensors inside v7x's 64 MiB / v5e's 16 MiB-default scoped VMEM and
    # gives the pipeline more steps); otherwise the full sequence.
    if q_tile is None:
        q_tile = S
        for cand in (256, 128, 64, 32, 16, 8):
            if cand <= S and S % cand == 0:
                q_tile = cand
                break
    assert S % q_tile == 0
    num_q_tiles = S // q_tile

    bf16, f32 = jnp.bfloat16, jnp.float32
    scale = 1.0 / math.sqrt(d_k)

    # Host-side weight prep: bf16 cast, 1/sqrt(d_k) folded into Wq/bq, and
    # Q/K/V weights/biases stacked into single tensors (fewer specs, less
    # double-buffered weight VMEM). Biases stay f32 (added after f32 accum).
    wqkv = jnp.stack([(params["wq"] * scale).astype(bf16),
                      params["wk"].astype(bf16),
                      params["wv"].astype(bf16)], axis=0)            # (3, D, D)
    bqkv = jnp.stack([(params["bq"] * scale).astype(f32),
                      params["bk"].astype(f32),
                      params["bv"].astype(f32)], axis=0)             # (3, 1, D)
    wo = params["wo"].astype(bf16)                                   # (D, D)
    bo = params["bo"].astype(f32)                                    # (1, D)

    # bf16 activations at the kernel boundary (the kernel consumes bf16 MXU
    # operands anyway); output stays f32.
    q_bf = q.astype(bf16)
    k_bf = k.astype(bf16)
    v_bf = v.astype(bf16)

    q_spec = pl.BlockSpec((1, q_tile, D), lambda b, i: (b, i, 0))
    kv_spec = pl.BlockSpec((1, S, D), lambda b, i: (b, 0, 0))
    wqkv_spec = pl.BlockSpec((3, D, D), lambda b, i: (0, 0, 0))
    bqkv_spec = pl.BlockSpec((3, 1, D), lambda b, i: (0, 0, 0))
    wo_spec = pl.BlockSpec((D, D), lambda b, i: (0, 0))
    bo_spec = pl.BlockSpec((1, D), lambda b, i: (0, 0))
    out_spec = pl.BlockSpec((1, q_tile, D), lambda b, i: (b, i, 0))

    vmem_limit = int(min(max(1.5 * _vmem_bytes_estimate(S, D, heads, q_tile),
                             16 * 2**20),
                         64 * 2**20))

    cost = pl.CostEstimate(
        flops=int(8 * B * S * D * D + 4 * B * heads * S * S * d_k),
        transcendentals=int(B * heads * S * S),
        bytes_accessed=int(3 * B * S * D * 2          # q, k, v (bf16)
                           + (3 * D * D + D * D) * 2  # weights (bf16)
                           + 4 * D * 4                # biases (f32)
                           + B * S * D * 4),          # output (f32)
    )

    kernel = functools.partial(_mha_kernel, heads=heads, d_k=d_k)

    return pl.pallas_call(
        kernel,
        out_shape=jax.ShapeDtypeStruct((B, S, D), out_dtype),
        grid_spec=pltpu.PrefetchScalarGridSpec(
            num_scalar_prefetch=0,
            grid=(B, num_q_tiles),
            in_specs=[
                q_spec, kv_spec, kv_spec,
                wqkv_spec, bqkv_spec,
                wo_spec, bo_spec,
            ],
            out_specs=out_spec,
            scratch_shapes=[
                pltpu.VMEM((S, D), jnp.bfloat16),   # cached K projection (lane-dense)
                pltpu.VMEM((S, D), jnp.bfloat16),   # cached V projection (lane-dense)
            ],
        ),
        compiler_params=pltpu.CompilerParams(
            dimension_semantics=("parallel", "arbitrary"),
            vmem_limit_bytes=vmem_limit),
        cost_estimate=cost,
    )(q_bf, k_bf, v_bf, wqkv, bqkv, wo, bo)


def init_params(key, d_model):
    """Deterministic init mimicking nn.Linear default (uniform +-1/sqrt(fan_in)).
    Weights stored already transposed: y = x @ W + b."""
    bound = 1.0 / math.sqrt(d_model)
    ks = jax.random.split(key, 8)
    def w(k): return jax.random.uniform(k, (d_model, d_model), jnp.float32, -bound, bound)
    def b(k): return jax.random.uniform(k, (1, d_model), jnp.float32, -bound, bound)
    return {
        "wq": w(ks[0]), "bq": b(ks[1]),
        "wk": w(ks[2]), "bk": b(ks[3]),
        "wv": w(ks[4]), "bv": b(ks[5]),
        "wo": w(ks[6]), "bo": b(ks[7]),
    }


def reference_mha(q, k, v, params, *, heads):
    """Pure-JAX f32 reference mirroring the PyTorch forward (mask=None, eval)."""
    B, S, D = q.shape
    d_k = D // heads
    def lin(x, w, b): return x @ w + b[0]
    qp = lin(q, params["wq"], params["bq"]).reshape(B, S, heads, d_k).transpose(0, 2, 1, 3)
    kp = lin(k, params["wk"], params["bk"]).reshape(B, S, heads, d_k).transpose(0, 2, 1, 3)
    vp = lin(v, params["wv"], params["bv"]).reshape(B, S, heads, d_k).transpose(0, 2, 1, 3)
    scores = jnp.einsum("bhqd,bhkd->bhqk", qp, kp) / math.sqrt(d_k)
    scores = jax.nn.softmax(scores, axis=-1)
    out = jnp.einsum("bhqk,bhkd->bhqd", scores, vp)
    concat = out.transpose(0, 2, 1, 3).reshape(B, S, D)
    return lin(concat, params["wo"], params["bo"])


if __name__ == "__main__":
    B, S, D, H = 2, 8, 32, 4   # batch, seq, d_model, heads

    key = jax.random.PRNGKey(0)
    kq, kk, kv, kp = jax.random.split(key, 4)
    q = jax.random.normal(kq, (B, S, D), jnp.float32)
    k = jax.random.normal(kk, (B, S, D), jnp.float32)
    v = jax.random.normal(kv, (B, S, D), jnp.float32)
    params = init_params(kp, D)

    out = multi_head_attention(q, k, v, params, heads=H)
    out = jax.block_until_ready(out)

    ref = reference_mha(q, k, v, params, heads=H)
    assert out.shape == (B, S, D)
    max_err = float(jnp.max(jnp.abs(out - ref)))
    # bf16 MXU operands with f32 accumulation + approx reciprocal -> ~1e-2
    # level agreement vs the f32 reference.
    assert jnp.allclose(out, ref, atol=5e-2, rtol=5e-2), \
        f"mismatch vs JAX reference (max abs err {max_err})"

    print("KERNEL_OK")
</pallas_src>

<mosaic_0001>
module attributes {stable_mosaic.version = 11 : i64} {
  func.func @_mha_kernel(%arg0: i32, %arg1: i32, %arg2: memref<1x8x32xbf16, #tpu.memory_space<vmem>>, %arg3: memref<1x8x32xbf16, #tpu.memory_space<vmem>>, %arg4: memref<1x8x32xbf16, #tpu.memory_space<vmem>>, %arg5: memref<3x32x32xbf16, #tpu.memory_space<vmem>>, %arg6: memref<3x1x32xf32, #tpu.memory_space<vmem>>, %arg7: memref<32x32xbf16, #tpu.memory_space<vmem>>, %arg8: memref<1x32xf32, #tpu.memory_space<vmem>>, %arg9: memref<1x8x32xf32, #tpu.memory_space<vmem>>, %arg10: memref<8x32xbf16, #tpu.memory_space<vmem>>, %arg11: memref<8x32xbf16, #tpu.memory_space<vmem>>) attributes {dimension_semantics = [#tpu.dimension_semantics<parallel>, #tpu.dimension_semantics<arbitrary>], iteration_bounds = array<i64: 2, 1>, scalar_prefetch = 0 : i64, scratch_operands = 2 : i64, tpu.core_type = #tpu.core_type<tc>, window_params = [{transform_indices = @transform_0, window_bounds = array<i64: 1, 8, 32>}, {transform_indices = @transform_1, window_bounds = array<i64: 1, 8, 32>}, {transform_indices = @transform_2, window_bounds = array<i64: 1, 8, 32>}, {pipeline_mode = #tpu.pipeline_mode<synchronous>, transform_indices = @transform_3, window_bounds = array<i64: 3, 32, 32>}, {pipeline_mode = #tpu.pipeline_mode<synchronous>, transform_indices = @transform_4, window_bounds = array<i64: 3, 1, 32>}, {pipeline_mode = #tpu.pipeline_mode<synchronous>, transform_indices = @transform_5, window_bounds = array<i64: 32, 32>}, {pipeline_mode = #tpu.pipeline_mode<synchronous>, transform_indices = @transform_6, window_bounds = array<i64: 1, 32>}, {transform_indices = @transform_7, window_bounds = array<i64: 1, 8, 32>}]} {
    %c0_i32 = arith.constant 0 : i32
    %0 = arith.cmpi eq, %arg1, %c0_i32 : i32
    %1 = arith.extui %0 : i1 to i32
    %c0_i32_0 = arith.constant 0 : i32
    %2 = arith.cmpi ne, %1, %c0_i32_0 : i32
    scf.if %2 {
      %c0_25 = arith.constant 0 : index
      %c0_26 = arith.constant 0 : index
      %c0_27 = arith.constant 0 : index
      %45 = vector.load %arg3[%c0_25, %c0_26, %c0_27] : memref<1x8x32xbf16, #tpu.memory_space<vmem>>, vector<1x8x32xbf16>
      %46 = vector.shape_cast %45 : vector<1x8x32xbf16> to vector<8x32xbf16>
      %c1 = arith.constant 1 : index
      %c0_28 = arith.constant 0 : index
      %c0_29 = arith.constant 0 : index
      %47 = vector.load %arg5[%c1, %c0_28, %c0_29] : memref<3x32x32xbf16, #tpu.memory_space<vmem>>, vector<1x32x32xbf16>
      %48 = vector.shape_cast %47 : vector<1x32x32xbf16> to vector<32x32xbf16>
      %cst_30 = arith.constant dense<0.000000e+00> : vector<8x32xf32>
      %49 = tpu.matmul %46, %48, %cst_30 {dimension_numbers = #tpu.dot_dimension_numbers<[1], [0], [0], [1], [0, 0, 1, 1], [], []>} : vector<8x32xbf16>, vector<32x32xbf16>, vector<8x32xf32> -> vector<8x32xf32>
      %c1_31 = arith.constant 1 : index
      %c0_32 = arith.constant 0 : index
      %c0_33 = arith.constant 0 : index
      %50 = vector.load %arg6[%c1_31, %c0_32, %c0_33] : memref<3x1x32xf32, #tpu.memory_space<vmem>>, vector<1x1x32xf32>
      %51 = vector.shape_cast %50 : vector<1x1x32xf32> to vector<1x32xf32>
      %52 = vector.broadcast %51 : vector<1x32xf32> to vector<8x32xf32>
      %53 = arith.addf %49, %52 : vector<8x32xf32>
      %c0_34 = arith.constant 0 : index
      %c0_35 = arith.constant 0 : index
      %c0_36 = arith.constant 0 : index
      %54 = vector.load %arg4[%c0_34, %c0_35, %c0_36] : memref<1x8x32xbf16, #tpu.memory_space<vmem>>, vector<1x8x32xbf16>
      %55 = vector.shape_cast %54 : vector<1x8x32xbf16> to vector<8x32xbf16>
      %c2 = arith.constant 2 : index
      %c0_37 = arith.constant 0 : index
      %c0_38 = arith.constant 0 : index
      %56 = vector.load %arg5[%c2, %c0_37, %c0_38] : memref<3x32x32xbf16, #tpu.memory_space<vmem>>, vector<1x32x32xbf16>
      %57 = vector.shape_cast %56 : vector<1x32x32xbf16> to vector<32x32xbf16>
      %cst_39 = arith.constant dense<0.000000e+00> : vector<8x32xf32>
      %58 = tpu.matmul %55, %57, %cst_39 {dimension_numbers = #tpu.dot_dimension_numbers<[1], [0], [0], [1], [0, 0, 1, 1], [], []>} : vector<8x32xbf16>, vector<32x32xbf16>, vector<8x32xf32> -> vector<8x32xf32>
      %c2_40 = arith.constant 2 : index
      %c0_41 = arith.constant 0 : index
      %c0_42 = arith.constant 0 : index
      %59 = vector.load %arg6[%c2_40, %c0_41, %c0_42] : memref<3x1x32xf32, #tpu.memory_space<vmem>>, vector<1x1x32xf32>
      %60 = vector.shape_cast %59 : vector<1x1x32xf32> to vector<1x32xf32>
      %61 = vector.broadcast %60 : vector<1x32xf32> to vector<8x32xf32>
      %62 = arith.addf %58, %61 : vector<8x32xf32>
      %63 = arith.truncf %53 : vector<8x32xf32> to vector<8x32xbf16>
      %c0_43 = arith.constant 0 : index
      %c0_44 = arith.constant 0 : index
      %64 = vector.load %arg10[%c0_43, %c0_44] : memref<8x32xbf16, #tpu.memory_space<vmem>>, vector<8x32xbf16>
      tpu.vector_store %arg10[%c0_43, %c0_44], %63 {strides = array<i32>} : memref<8x32xbf16, #tpu.memory_space<vmem>>, vector<8x32xbf16>,
      %65 = arith.truncf %62 : vector<8x32xf32> to vector<8x32xbf16>
      %c0_45 = arith.constant 0 : index
      %c0_46 = arith.constant 0 : index
      %66 = vector.load %arg11[%c0_45, %c0_46] : memref<8x32xbf16, #tpu.memory_space<vmem>>, vector<8x32xbf16>
      tpu.vector_store %arg11[%c0_45, %c0_46], %65 {strides = array<i32>} : memref<8x32xbf16, #tpu.memory_space<vmem>>, vector<8x32xbf16>,
    } else {
    }
    %c0 = arith.constant 0 : index
    %c0_1 = arith.constant 0 : index
    %c0_2 = arith.constant 0 : index
    %3 = vector.load %arg2[%c0, %c0_1, %c0_2] : memref<1x8x32xbf16, #tpu.memory_space<vmem>>, vector<1x8x32xbf16>
    %4 = vector.shape_cast %3 : vector<1x8x32xbf16> to vector<8x32xbf16>
    %c0_3 = arith.constant 0 : index
    %c0_4 = arith.constant 0 : index
    %c0_5 = arith.constant 0 : index
    %5 = vector.load %arg5[%c0_3, %c0_4, %c0_5] : memref<3x32x32xbf16, #tpu.memory_space<vmem>>, vector<1x32x32xbf16>
    %6 = vector.shape_cast %5 : vector<1x32x32xbf16> to vector<32x32xbf16>
    %cst = arith.constant dense<0.000000e+00> : vector<8x32xf32>
    %7 = tpu.matmul %4, %6, %cst {dimension_numbers = #tpu.dot_dimension_numbers<[1], [0], [0], [1], [0, 0, 1, 1], [], []>} : vector<8x32xbf16>, vector<32x32xbf16>, vector<8x32xf32> -> vector<8x32xf32>
    %c0_6 = arith.constant 0 : index
    %c0_7 = arith.constant 0 : index
    %c0_8 = arith.constant 0 : index
    %8 = vector.load %arg6[%c0_6, %c0_7, %c0_8] : memref<3x1x32xf32, #tpu.memory_space<vmem>>, vector<1x1x32xf32>
    %9 = vector.shape_cast %8 : vector<1x1x32xf32> to vector<1x32xf32>
    %10 = vector.broadcast %9 : vector<1x32xf32> to vector<8x32xf32>
    %11 = arith.addf %7, %10 : vector<8x32xf32>
    %12 = vector.shape_cast %11 : vector<8x32xf32> to vector<8x4x8xf32>
    %13 = tpu.transpose %12, [1, 0, 2] : vector<8x4x8xf32> -> vector<4x8x8xf32>
    %14 = arith.truncf %13 : vector<4x8x8xf32> to vector<4x8x8xbf16>
    %c0_9 = arith.constant 0 : index
    %c0_10 = arith.constant 0 : index
    %15 = vector.load %arg10[%c0_9, %c0_10] : memref<8x32xbf16, #tpu.memory_space<vmem>>, vector<8x32xbf16>
    %16 = vector.shape_cast %15 : vector<8x32xbf16> to vector<8x4x8xbf16>
    %17 = tpu.transpose %16, [1, 0, 2] : vector<8x4x8xbf16> -> vector<4x8x8xbf16>
    %c0_11 = arith.constant 0 : index
    %c0_12 = arith.constant 0 : index
    %18 = vector.load %arg11[%c0_11, %c0_12] : memref<8x32xbf16, #tpu.memory_space<vmem>>, vector<8x32xbf16>
    %19 = vector.shape_cast %18 : vector<8x32xbf16> to vector<8x4x8xbf16>
    %20 = tpu.transpose %19, [1, 0, 2] : vector<8x4x8xbf16> -> vector<4x8x8xbf16>
    "tpu.trace_start"() <{level = 10 : i32, message = "hqd,hkd->hqk"}> : () -> ()
    %cst_13 = arith.constant dense<0.000000e+00> : vector<4x8x8xf32>
    %21 = tpu.matmul %14, %17, %cst_13 {dimension_numbers = #tpu.dot_dimension_numbers<[2], [2], [1], [1], [0, 0, 0, 1, 1, 1], [0], [0]>} : vector<4x8x8xbf16>, vector<4x8x8xbf16>, vector<4x8x8xf32> -> vector<4x8x8xf32>
    "tpu.trace_stop"() : () -> ()
    %cst_14 = arith.constant dense<0xFF800000> : vector<4x8xf32>
    %22 = vector.multi_reduction <maximumf>, %21, %cst_14 [2] : vector<4x8x8xf32> to vector<4x8xf32>
    %23 = vector.shape_cast %22 : vector<4x8xf32> to vector<4x8x1xf32>
    %24 = vector.broadcast %23 : vector<4x8x1xf32> to vector<4x8x8xf32>
    %25 = arith.subf %21, %24 : vector<4x8x8xf32>
    %26 = math.exp %25 : vector<4x8x8xf32>
    %cst_15 = arith.constant dense<0.000000e+00> : vector<4x8xf32>
    %27 = vector.multi_reduction <add>, %26, %cst_15 [2] : vector<4x8x8xf32> to vector<4x8xf32>
    %28 = vector.shape_cast %27 : vector<4x8xf32> to vector<4x8x1xf32>
    %29 = tpu.reciprocal %28 {approx = true} : vector<4x8x1xf32> -> vector<4x8x1xf32>
    %30 = vector.broadcast %29 : vector<4x8x1xf32> to vector<4x8x8xf32>
    %31 = arith.mulf %26, %30 : vector<4x8x8xf32>
    %32 = arith.truncf %31 : vector<4x8x8xf32> to vector<4x8x8xbf16>
    "tpu.trace_start"() <{level = 10 : i32, message = "hqk,hkd->hqd"}> : () -> ()
    %cst_16 = arith.constant dense<0.000000e+00> : vector<4x8x8xf32>
    %33 = tpu.matmul %32, %20, %cst_16 {dimension_numbers = #tpu.dot_dimension_numbers<[2], [1], [1], [2], [0, 0, 0, 1, 1, 2], [0], [0]>} : vector<4x8x8xbf16>, vector<4x8x8xbf16>, vector<4x8x8xf32> -> vector<4x8x8xf32>
    "tpu.trace_stop"() : () -> ()
    %34 = tpu.transpose %33, [1, 0, 2] : vector<4x8x8xf32> -> vector<8x4x8xf32>
    %35 = vector.shape_cast %34 : vector<8x4x8xf32> to vector<8x32xf32>
    %36 = arith.truncf %35 : vector<8x32xf32> to vector<8x32xbf16>
    %c0_17 = arith.constant 0 : index
    %c0_18 = arith.constant 0 : index
    %37 = vector.load %arg7[%c0_17, %c0_18] : memref<32x32xbf16, #tpu.memory_space<vmem>>, vector<32x32xbf16>
    %cst_19 = arith.constant dense<0.000000e+00> : vector<8x32xf32>
    %38 = tpu.matmul %36, %37, %cst_19 {dimension_numbers = #tpu.dot_dimension_numbers<[1], [0], [0], [1], [0, 0, 1, 1], [], []>} : vector<8x32xbf16>, vector<32x32xbf16>, vector<8x32xf32> -> vector<8x32xf32>
    %c0_20 = arith.constant 0 : index
    %c0_21 = arith.constant 0 : index
    %39 = vector.load %arg8[%c0_20, %c0_21] : memref<1x32xf32, #tpu.memory_space<vmem>>, vector<1x32xf32>
    %40 = vector.broadcast %39 : vector<1x32xf32> to vector<8x32xf32>
    %41 = arith.addf %38, %40 : vector<8x32xf32>
    %c0_22 = arith.constant 0 : index
    %c0_23 = arith.constant 0 : index
    %c0_24 = arith.constant 0 : index
    %42 = vector.load %arg9[%c0_22, %c0_23, %c0_24] : memref<1x8x32xf32, #tpu.memory_space<vmem>>, vector<1x8x32xf32>
    %43 = vector.shape_cast %42 : vector<1x8x32xf32> to vector<8x32xf32>
    %44 = vector.shape_cast %41 : vector<8x32xf32> to vector<1x8x32xf32>
    tpu.vector_store %arg9[%c0_22, %c0_23, %c0_24], %44 {strides = array<i32>} : memref<1x8x32xf32, #tpu.memory_space<vmem>>, vector<1x8x32xf32>,
    return
  }
  func.func @transform_0(%arg0: i32, %arg1: i32) -> (i32, i32, i32) {
    %c0_i32 = arith.constant 0 : i32
    %c0_i32_0 = arith.constant 0 : i32
    return %arg0, %arg1, %c0_i32 : i32, i32, i32
  }
  func.func @transform_1(%arg0: i32, %arg1: i32) -> (i32, i32, i32) {
    %c0_i32 = arith.constant 0 : i32
    %c0_i32_0 = arith.constant 0 : i32
    %c0_i32_1 = arith.constant 0 : i32
    return %arg0, %c0_i32, %c0_i32_0 : i32, i32, i32
  }
  func.func @transform_2(%arg0: i32, %arg1: i32) -> (i32, i32, i32) {
    %c0_i32 = arith.constant 0 : i32
    %c0_i32_0 = arith.constant 0 : i32
    %c0_i32_1 = arith.constant 0 : i32
    return %arg0, %c0_i32, %c0_i32_0 : i32, i32, i32
  }
  func.func @transform_3(%arg0: i32, %arg1: i32) -> (i32, i32, i32) {
    %c0_i32 = arith.constant 0 : i32
    %c0_i32_0 = arith.constant 0 : i32
    %c0_i32_1 = arith.constant 0 : i32
    %c0_i32_2 = arith.constant 0 : i32
    return %c0_i32, %c0_i32_0, %c0_i32_1 : i32, i32, i32
  }
  func.func @transform_4(%arg0: i32, %arg1: i32) -> (i32, i32, i32) {
    %c0_i32 = arith.constant 0 : i32
    %c0_i32_0 = arith.constant 0 : i32
    %c0_i32_1 = arith.constant 0 : i32
    %c0_i32_2 = arith.constant 0 : i32
    return %c0_i32, %c0_i32_0, %c0_i32_1 : i32, i32, i32
  }
  func.func @transform_5(%arg0: i32, %arg1: i32) -> (i32, i32) {
    %c0_i32 = arith.constant 0 : i32
    %c0_i32_0 = arith.constant 0 : i32
    %c0_i32_1 = arith.constant 0 : i32
    return %c0_i32, %c0_i32_0 : i32, i32
  }
  func.func @transform_6(%arg0: i32, %arg1: i32) -> (i32, i32) {
    %c0_i32 = arith.constant 0 : i32
    %c0_i32_0 = arith.constant 0 : i32
    %c0_i32_1 = arith.constant 0 : i32
    return %c0_i32, %c0_i32_0 : i32, i32
  }
  func.func @transform_7(%arg0: i32, %arg1: i32) -> (i32, i32, i32) {
    %c0_i32 = arith.constant 0 : i32
    %c0_i32_0 = arith.constant 0 : i32
    return %arg0, %arg1, %c0_i32 : i32, i32, i32
  }
}

</mosaic_0001>

<llo_original>
// kernel: tpu_custom_call.1
$region0: #{tpu_custom_call.1}
  #allocation0 [shape = 'u32[]', space=smem, size = 0x4, offset = 0x4, fixed_abs, tag = 'smem constant byte address 0x4 - core index']
  #allocation1 [shape = 'u32[144,128]{1,0:T(1,128)}', space=vmem, size = 0x12000, scoped, tag = 'internal scratch']
  #allocation2 [shape = 'bf16[8,32]{1,0:T(8,128)(2,1)}', space=vmem, size = 0x800, scoped, tag = 'scratch operand']
  #allocation3 [shape = 'bf16[8,32]{1,0:T(8,128)(2,1)}', space=vmem, size = 0x800, scoped, tag = 'scratch operand']
  %s0 = inlined_call_operand.hbm [shape: bf16[2,8,32], index: 0, kind: input, shape index: {}]
  %s1 = inlined_call_operand.hbm [shape: bf16[2,8,32], index: 1, kind: input, shape index: {}]
  %s2 = inlined_call_operand.hbm [shape: bf16[2,8,32], index: 2, kind: input, shape index: {}]
  %s3 = inlined_call_operand.hbm [shape: bf16[3,32,32], index: 3, kind: input, shape index: {}]
  %s4 = inlined_call_operand.hbm [shape: f32[3,1,32], index: 4, kind: input, shape index: {}]
  %s5 = inlined_call_operand.vmem [shape: bf16[32,32], index: 5, kind: input, shape index: {}]
  %s6 = inlined_call_operand.vmem [shape: f32[1,32], index: 6, kind: input, shape index: {}]
  %s7 = inlined_call_operand.hbm [shape: f32[2,8,32], index: 7, kind: output, shape index: {}]
  %s8 = sld [smem:[#allocation0]]
  $region85: #{tpu_custom_call.1} parent=0
    _
  %s10 = ssub.s32 1, %s8
  %s11 = scalar_select 0, %s10, %s8
  $region1: #{tpu_custom_call.1} parent=0
    #allocation4 [shape = 'u8[4096]{0}', space=vmem, size = 0x1000, scoped, tag = 'input window, operand 0']
    #allocation5 [shape = 's32[2]{0}', space=sflag, size = 0x8, scoped, tag = 'scoped memory for tpu_custom_call.1']
    #allocation6 [shape = 's32[2]{0}', space=sflag, size = 0x8, scoped, tag = 'scoped memory for tpu_custom_call.1']
    #allocation7 [shape = 'u8[4096]{0}', space=vmem, size = 0x1000, scoped, tag = 'input window, operand 1']
    #allocation8 [shape = 's32[2]{0}', space=sflag, size = 0x8, scoped, tag = 'scoped memory for tpu_custom_call.1']
    #allocation9 [shape = 'u8[4096]{0}', space=vmem, size = 0x1000, scoped, tag = 'input window, operand 2']
    #allocation10 [shape = 'u8[24576]{0}', space=vmem, size = 0x6000, scoped, tag = 'input window, operand 3, single buffered']
    #allocation11 [shape = 's32[1]{0}', space=sflag, size = 0x4, scoped, tag = 'scoped memory for tpu_custom_call.1']
    #allocation12 [shape = 'u8[1536]{0}', space=vmem, size = 0x800, scoped, tag = 'input window, operand 4, single buffered']
    #allocation13 [shape = 'u8[8192]{0}', space=vmem, size = 0x2000, scoped, tag = 'output window, operand 0']
    %12 = vsyncpa [#allocation5], 0
    %s13 = scalar_lea.sflag [#allocation5], 1
    %14 = vsyncpa %s13, 0
    %15 = vsyncpa [#allocation8], 0
    %s16 = scalar_lea.sflag [#allocation8], 1
    %17 = vsyncpa %s16, 0
    %18 = vsyncpa [#allocation11], 0
    %19 = vsyncpa [#allocation6], 0
    %s20 = scalar_lea.sflag [#allocation6], 1
    %21 = vsyncpa %s20, 0
    loop: start=0, step=1, limit=4
    $region2: #{tpu_custom_call.1} parent=1 // loop_pre_header
      _
    $region3: #{tpu_custom_call.1} parent=1 // loop_header
      %s23 = sphi 0, %s27
      %p24 = scmp.ge.s32.totalorder %s23, 4
      %s30 = sphi 0, %s42
      %s31 = sphi 0, %s38
      %s32 = sphi 0, %s30
      %s33 = sphi 0, %s31
      %s34 = sphi 0, %s32
      %s35 = sphi 0, %s33
      %s47 = sphi 0, %s49
      %s50 = sphi 0, %s47
      %s51 = sphi 0, %s50
      %s67 = sphi 0, %s51
      %s73 = sphi 0, %s75
      %s76 = sphi 0, %s73
      %s77 = sphi 0, %s76
      %s93 = sphi 0, %s77
      %s99 = sphi 0, %s101
      %s102 = sphi 0, %s99
      %s103 = sphi 0, %s102
      %s119 = sphi 0, %s103
      %s123 = sphi 0, %s123
      %s125 = sphi 0, %s123
      %s126 = sphi 0, %s125
      %s140 = sphi 0, %s126
      %s144 = sphi 0, %s144
      %s146 = sphi 0, %s144
      %s147 = sphi 0, %s146
      %s161 = sphi 0, %s147
      %s165 = sphi 0, %s165
      %s167 = sphi 0, %s165
      %s168 = sphi 0, %s167
      %s182 = sphi 0, %s168
      %s186 = sphi 0, %s186
      %s188 = sphi 0, %s186
      %s189 = sphi 0, %s188
      %s203 = sphi 0, %s189
      %s211 = sphi 0, %s213
      %s214 = sphi 0, %s211
      %s215 = sphi 0, %s214
      %s231 = sphi 0, %s215
    $region4: #{tpu_custom_call.1} parent=1 // loop_header_branch
      %26 = sbr.rel (%p24) target = $region8
    $region5: #{tpu_custom_call.1} parent=1 // loop_body
      %s28 = ssub.s32 %s23, 1
      %s29 = ssub.s32 %s23, 2
      %s36 = sadd.s32 1, %s31
      %p37 = scmp.ge.s32.totalorder %s36, 1
      %s38 = scalar_select %p37, 0, %s36
      %s39 = sadd.s32 1, %s30
      %s40 = scalar_select %p37, %s39, %s30
      %p41 = scmp.ge.s32.totalorder %s40, 2
      %s42 = scalar_select %p41, 0, %s40
      %s43 = ssub.s32 %s30, %s42
      %s44 = ssub.s32 %s31, %s38
      %s45 = sor.u32 %s43, %s44
      %p46 = scmp.eq.s32.totalorder %s45, 0
      %s48 = sadd.s32 %s47, 1
      %s49 = scalar_select %p46, %s47, %s48
      %p52 = pneg %p46
      %p53 = scmp.eq.s32.totalorder %s23, 1
      %p54 = por %p52, %p53
      %p55 = scmp.ne.s32.totalorder %s47, %s50
      %p56 = scmp.eq.s32.totalorder %s23, 0
      %p57 = por %p55, %p56
      %p58 = scmp.ne.s32.totalorder %s47, %s50
      %p59 = scmp.eq.s32.totalorder %s28, 1
      %p60 = por %p58, %p59
      %p61 = scmp.ne.s32.totalorder %s50, %s51
      %p62 = scmp.eq.s32.totalorder %s28, 0
      %p63 = por %p61, %p62
      %p64 = scmp.ne.s32.totalorder %s50, %s51
      %p65 = scmp.eq.s32.totalorder %s29, 1
      %p66 = por %p64, %p65
      %p68 = scmp.ne.s32.totalorder %s51, %s67
      %p69 = scmp.eq.s32.totalorder %s29, 0
      %p70 = por %p68, %p69
      %s71 = ssub.s32 %s30, %s42
      %p72 = scmp.eq.s32.totalorder %s71, 0
      %s74 = sadd.s32 %s73, 1
      %s75 = scalar_select %p72, %s73, %s74
      %p78 = pneg %p72
      %p79 = scmp.eq.s32.totalorder %s23, 1
      %p80 = por %p78, %p79
      %p81 = scmp.ne.s32.totalorder %s73, %s76
      %p82 = scmp.eq.s32.totalorder %s23, 0
      %p83 = por %p81, %p82
      %p84 = scmp.ne.s32.totalorder %s73, %s76
      %p85 = scmp.eq.s32.totalorder %s28, 1
      %p86 = por %p84, %p85
      %p87 = scmp.ne.s32.totalorder %s76, %s77
      %p88 = scmp.eq.s32.totalorder %s28, 0
      %p89 = por %p87, %p88
      %p90 = scmp.ne.s32.totalorder %s76, %s77
      %p91 = scmp.eq.s32.totalorder %s29, 1
      %p92 = por %p90, %p91
      %p94 = scmp.ne.s32.totalorder %s77, %s93
      %p95 = scmp.eq.s32.totalorder %s29, 0
      %p96 = por %p94, %p95
      %s97 = ssub.s32 %s30, %s42
      %p98 = scmp.eq.s32.totalorder %s97, 0
      %s100 = sadd.s32 %s99, 1
      %s101 = scalar_select %p98, %s99, %s100
      %p104 = pneg %p98
      %p105 = scmp.eq.s32.totalorder %s23, 1
      %p106 = por %p104, %p105
      %p107 = scmp.ne.s32.totalorder %s99, %s102
      %p108 = scmp.eq.s32.totalorder %s23, 0
      %p109 = por %p107, %p108
      %p110 = scmp.ne.s32.totalorder %s99, %s102
      %p111 = scmp.eq.s32.totalorder %s28, 1
      %p112 = por %p110, %p111
      %p113 = scmp.ne.s32.totalorder %s102, %s103
      %p114 = scmp.eq.s32.totalorder %s28, 0
      %p115 = por %p113, %p114
      %p116 = scmp.ne.s32.totalorder %s102, %s103
      %p117 = scmp.eq.s32.totalorder %s29, 1
      %p118 = por %p116, %p117
      %p120 = scmp.ne.s32.totalorder %s103, %s119
      %p121 = scmp.eq.s32.totalorder %s29, 0
      %p122 = por %p120, %p121
      %s124 = sadd.s32 %s123, 1
      %p127 = scmp.eq.s32.totalorder %s23, 1
      %p128 = scmp.ne.s32.totalorder %s123, %s125
      %p129 = scmp.eq.s32.totalorder %s23, 0
      %p130 = por %p128, %p129
      %p131 = scmp.ne.s32.totalorder %s123, %s125
      %p132 = scmp.eq.s32.totalorder %s28, 1
      %p133 = por %p131, %p132
      %p134 = scmp.ne.s32.totalorder %s125, %s126
      %p135 = scmp.eq.s32.totalorder %s28, 0
      %p136 = por %p134, %p135
      %p137 = scmp.ne.s32.totalorder %s125, %s126
      %p138 = scmp.eq.s32.totalorder %s29, 1
      %p139 = por %p137, %p138
      %p141 = scmp.ne.s32.totalorder %s126, %s140
      %p142 = scmp.eq.s32.totalorder %s29, 0
      %p143 = por %p141, %p142
      %s145 = sadd.s32 %s144, 1
      %p148 = scmp.eq.s32.totalorder %s23, 1
      %p149 = scmp.ne.s32.totalorder %s144, %s146
      %p150 = scmp.eq.s32.totalorder %s23, 0
      %p151 = por %p149, %p150
      %p152 = scmp.ne.s32.totalorder %s144, %s146
      %p153 = scmp.eq.s32.totalorder %s28, 1
      %p154 = por %p152, %p153
      %p155 = scmp.ne.s32.totalorder %s146, %s147
      %p156 = scmp.eq.s32.totalorder %s28, 0
      %p157 = por %p155, %p156
      %p158 = scmp.ne.s32.totalorder %s146, %s147
      %p159 = scmp.eq.s32.totalorder %s29, 1
      %p160 = por %p158, %p159
      %p162 = scmp.ne.s32.totalorder %s147, %s161
      %p163 = scmp.eq.s32.totalorder %s29, 0
      %p164 = por %p162, %p163
      %s166 = sadd.s32 %s165, 1
      %p169 = scmp.eq.s32.totalorder %s23, 1
      %p170 = scmp.ne.s32.totalorder %s165, %s167
      %p171 = scmp.eq.s32.totalorder %s23, 0
      %p172 = por %p170, %p171
      %p173 = scmp.ne.s32.totalorder %s165, %s167
      %p174 = scmp.eq.s32.totalorder %s28, 1
      %p175 = por %p173, %p174
      %p176 = scmp.ne.s32.totalorder %s167, %s168
      %p177 = scmp.eq.s32.totalorder %s28, 0
      %p178 = por %p176, %p177
      %p179 = scmp.ne.s32.totalorder %s167, %s168
      %p180 = scmp.eq.s32.totalorder %s29, 1
      %p181 = por %p179, %p180
      %p183 = scmp.ne.s32.totalorder %s168, %s182
      %p184 = scmp.eq.s32.totalorder %s29, 0
      %p185 = por %p183, %p184
      %s187 = sadd.s32 %s186, 1
      %p190 = scmp.eq.s32.totalorder %s23, 1
      %p191 = scmp.ne.s32.totalorder %s186, %s188
      %p192 = scmp.eq.s32.totalorder %s23, 0
      %p193 = por %p191, %p192
      %p194 = scmp.ne.s32.totalorder %s186, %s188
      %p195 = scmp.eq.s32.totalorder %s28, 1
      %p196 = por %p194, %p195
      %p197 = scmp.ne.s32.totalorder %s188, %s189
      %p198 = scmp.eq.s32.totalorder %s28, 0
      %p199 = por %p197, %p198
      %p200 = scmp.ne.s32.totalorder %s188, %s189
      %p201 = scmp.eq.s32.totalorder %s29, 1
      %p202 = por %p200, %p201
      %p204 = scmp.ne.s32.totalorder %s189, %s203
      %p205 = scmp.eq.s32.totalorder %s29, 0
      %p206 = por %p204, %p205
      %s207 = ssub.s32 %s30, %s42
      %s208 = ssub.s32 %s31, %s38
      %s209 = sor.u32 %s207, %s208
      %p210 = scmp.eq.s32.totalorder %s209, 0
      %s212 = sadd.s32 %s211, 1
      %s213 = scalar_select %p210, %s211, %s212
      %p216 = pneg %p210
      %p217 = scmp.eq.s32.totalorder %s23, 1
      %p218 = por %p216, %p217
      %p219 = scmp.ne.s32.totalorder %s211, %s214
      %p220 = scmp.eq.s32.totalorder %s23, 0
      %p221 = por %p219, %p220
      %p222 = scmp.ne.s32.totalorder %s211, %s214
      %p223 = scmp.eq.s32.totalorder %s28, 1
      %p224 = por %p222, %p223
      %p225 = scmp.ne.s32.totalorder %s214, %s215
      %p226 = scmp.eq.s32.totalorder %s28, 0
      %p227 = por %p225, %p226
      %p228 = scmp.ne.s32.totalorder %s214, %s215
      %p229 = scmp.eq.s32.totalorder %s29, 1
      %p230 = por %p228, %p229
      %p232 = scmp.ne.s32.totalorder %s215, %s231
      %p233 = scmp.eq.s32.totalorder %s29, 0
      %p234 = por %p232, %p233
      %p235 = scmp.le.s32.totalorder 1, %s23
      %p236 = scmp.lt.s32.totalorder %s23, 3
      %p237 = pnand %p235, %p236
      %p238 = pneg %p237
      // Predicated region
      $region9: #{tpu_custom_call.1} parent=5 // pred_check
        _
      $region10: #{tpu_custom_call.1} parent=5 // pred_check_branch
        %240 = sbr.rel (%p237) target = $region12
      $region11: #{tpu_custom_call.1} parent=5 // pred_region
        %s241 = ssub.s32 %s23, 1
        // Predicated region
        $region13: #{tpu_custom_call.1} parent=11 // pred_check
          %p242 = pneg %p136
        $region14: #{tpu_custom_call.1} parent=11 // pred_check_branch
          %244 = sbr.rel (%p242) target = $region16
        $region15: #{tpu_custom_call.1} parent=11 // pred_region
          %s246 = ssub.s32 768, 768
          %247 = vsyncadd [#allocation11], %s246
          %s248 = sshll.u32 [#allocation10], 4
          %s249 = int_to_ptr.vmem [resolvable:$true] %s248
          %254 = dma.hbm_to_vmem [thread:$0]  %s3, 768, %s249, [#allocation11], 64, 64, 4
        $region16: #{tpu_custom_call.1} parent=11 // pred_fallthru
          _
        // Predicated region
        $region17: #{tpu_custom_call.1} parent=11 // pred_check
          %p255 = pneg %p157
        $region18: #{tpu_custom_call.1} parent=11 // pred_check_branch
          %257 = sbr.rel (%p255) target = $region20
        $region19: #{tpu_custom_call.1} parent=11 // pred_region
          %s259 = ssub.s32 48, 48
          %260 = vsyncadd [#allocation11], %s259
          %s261 = sshll.u32 [#allocation12], 4
          %s262 = int_to_ptr.vmem [resolvable:$true] %s261
          %267 = dma.hbm_to_vmem [thread:$0]  %s4, 48, %s262, [#allocation11], 16, 16, 1
        $region20: #{tpu_custom_call.1} parent=11 // pred_fallthru
          _
        // Predicated region
        $region21: #{tpu_custom_call.1} parent=11 // pred_check
          %p268 = pneg %p178
        $region22: #{tpu_custom_call.1} parent=11 // pred_check_branch
          %270 = sbr.rel (%p268) target = $region24
        $region23: #{tpu_custom_call.1} parent=11 // pred_region
          _
        $region24: #{tpu_custom_call.1} parent=11 // pred_fallthru
          _
        // Predicated region
        $region25: #{tpu_custom_call.1} parent=11 // pred_check
          %p271 = pneg %p199
        $region26: #{tpu_custom_call.1} parent=11 // pred_check_branch
          %273 = sbr.rel (%p271) target = $region28
        $region27: #{tpu_custom_call.1} parent=11 // pred_region
          _
        $region28: #{tpu_custom_call.1} parent=11 // pred_fallthru
          _
      $region12: #{tpu_custom_call.1} parent=5 // pred_fallthru
        _
      %p274 = scmp.lt.s32.totalorder %s23, 2
      // Predicated region
      $region29: #{tpu_custom_call.1} parent=5 // pred_check
        %p275 = pneg %p274
      $region30: #{tpu_custom_call.1} parent=5 // pred_check_branch
        %277 = sbr.rel (%p275) target = $region32
      $region31: #{tpu_custom_call.1} parent=5 // pred_region
        // Predicated region
        $region33: #{tpu_custom_call.1} parent=31 // pred_check
          %p278 = pneg %p57
        $region34: #{tpu_custom_call.1} parent=31 // pred_check_branch
          %280 = sbr.rel (%p278) target = $region36
        $region35: #{tpu_custom_call.1} parent=31 // pred_region
          %s281 = sand.u32 %s47, 1
          %s282 = scalar_lea.sflag [#allocation5], %s281
          %s283 = sand.u32 %s47, 1
          %s284 = smul.addr %s283, 4
          %s285 = scalar_lea.vmem [#allocation4], %s284
          %s287 = ssub.s32 64, 64
          %288 = vsyncadd %s282, %s287
          %s289 = sadd.s32 %s31, %s30
          %s290 = smul.addr %s289, 64
          %s291 = scalar_lea.hbm %s0, %s290
          %s293 = sshll.u32 %s285, 4
          %s294 = int_to_ptr.vmem [resolvable:$true] %s293
          %296 = dma.hbm_to_vmem [thread:$0]  %s291, 64, %s294, %s282
        $region36: #{tpu_custom_call.1} parent=31 // pred_fallthru
          _
        // Predicated region
        $region37: #{tpu_custom_call.1} parent=31 // pred_check
          %p297 = pneg %p83
        $region38: #{tpu_custom_call.1} parent=31 // pred_check_branch
          %299 = sbr.rel (%p297) target = $region40
        $region39: #{tpu_custom_call.1} parent=31 // pred_region
          %s300 = sand.u32 %s23, 1
          %s301 = scalar_lea.sflag [#allocation8], %s300
          %s302 = sand.u32 %s73, 1
          %s303 = smul.addr %s302, 4
          %s304 = scalar_lea.vmem [#allocation7], %s303
          %s306 = ssub.s32 64, 64
          %307 = vsyncadd %s301, %s306
          %s308 = smul.addr %s30, 64
          %s309 = scalar_lea.hbm %s1, %s308
          %s311 = sshll.u32 %s304, 4
          %s312 = int_to_ptr.vmem [resolvable:$true] %s311
          %314 = dma.hbm_to_vmem [thread:$0]  %s309, 64, %s312, %s301
        $region40: #{tpu_custom_call.1} parent=31 // pred_fallthru
          _
        // Predicated region
        $region41: #{tpu_custom_call.1} parent=31 // pred_check
          %p315 = pneg %p109
        $region42: #{tpu_custom_call.1} parent=31 // pred_check_branch
          %317 = sbr.rel (%p315) target = $region44
        $region43: #{tpu_custom_call.1} parent=31 // pred_region
          %s318 = sand.u32 %s23, 1
          %s319 = scalar_lea.sflag [#allocation8], %s318
          %s320 = sand.u32 %s99, 1
          %s321 = smul.addr %s320, 4
          %s322 = scalar_lea.vmem [#allocation9], %s321
          %s324 = ssub.s32 64, 64
          %325 = vsyncadd %s319, %s324
          %s326 = smul.addr %s30, 64
          %s327 = scalar_lea.hbm %s2, %s326
          %s329 = sshll.u32 %s322, 4
          %s330 = int_to_ptr.vmem [resolvable:$true] %s329
          %332 = dma.hbm_to_vmem [thread:$0]  %s327, 64, %s330, %s319
        $region44: #{tpu_custom_call.1} parent=31 // pred_fallthru
          _
      $region32: #{tpu_custom_call.1} parent=5 // pred_fallthru
        _
      %p333 = scmp.le.s32.totalorder 1, %s23
      %p334 = scmp.lt.s32.totalorder %s23, 3
      %p335 = pnand %p333, %p334
      %p336 = pneg %p335
      // Predicated region
      $region45: #{tpu_custom_call.1} parent=5 // pred_check
        _
      $region46: #{tpu_custom_call.1} parent=5 // pred_check_branch
        %338 = sbr.rel (%p335) target = $region48
      $region47: #{tpu_custom_call.1} parent=5 // pred_region
        %s339 = ssub.s32 %s23, 1
        %s340 = sand.u32 %s50, 1
        %s341 = scalar_lea.sflag [#allocation5], %s340
        %s342 = sand.u32 %s50, 1
        %s343 = smul.addr %s342, 4
        %s344 = scalar_lea.vmem [#allocation4], %s343
        // Predicated region
        $region49: #{tpu_custom_call.1} parent=47 // pred_check
          %p345 = pneg %p63
        $region50: #{tpu_custom_call.1} parent=47 // pred_check_branch
          %347 = sbr.rel (%p345) target = $region52
        $region51: #{tpu_custom_call.1} parent=47 // pred_region
          %348 = dma.done %s341, 64
        $region52: #{tpu_custom_call.1} parent=47 // pred_fallthru
          _
        %s349 = sand.u32 %s28, 1
        %s350 = scalar_lea.sflag [#allocation8], %s349
        %s351 = sand.u32 %s76, 1
        %s352 = smul.addr %s351, 4
        %s353 = scalar_lea.vmem [#allocation7], %s352
        // Predicated region
        $region53: #{tpu_custom_call.1} parent=47 // pred_check
          %p354 = pneg %p89
        $region54: #{tpu_custom_call.1} parent=47 // pred_check_branch
          %356 = sbr.rel (%p354) target = $region56
        $region55: #{tpu_custom_call.1} parent=47 // pred_region
          %357 = dma.done %s350, 64
        $region56: #{tpu_custom_call.1} parent=47 // pred_fallthru
          _
        %s358 = sand.u32 %s28, 1
        %s359 = scalar_lea.sflag [#allocation8], %s358
        %s360 = sand.u32 %s102, 1
        %s361 = smul.addr %s360, 4
        %s362 = scalar_lea.vmem [#allocation9], %s361
        // Predicated region
        $region57: #{tpu_custom_call.1} parent=47 // pred_check
          %p363 = pneg %p115
        $region58: #{tpu_custom_call.1} parent=47 // pred_check_branch
          %365 = sbr.rel (%p363) target = $region60
        $region59: #{tpu_custom_call.1} parent=47 // pred_region
          %366 = dma.done %s359, 64
        $region60: #{tpu_custom_call.1} parent=47 // pred_fallthru
          _
        // Predicated region
        $region61: #{tpu_custom_call.1} parent=47 // pred_check
          %p367 = pneg %p136
        $region62: #{tpu_custom_call.1} parent=47 // pred_check_branch
          %369 = sbr.rel (%p367) target = $region64
        $region63: #{tpu_custom_call.1} parent=47 // pred_region
          %370 = dma.done [#allocation11], 768
        $region64: #{tpu_custom_call.1} parent=47 // pred_fallthru
          _
        // Predicated region
        $region65: #{tpu_custom_call.1} parent=47 // pred_check
          %p371 = pneg %p157
        $region66: #{tpu_custom_call.1} parent=47 // pred_check_branch
          %373 = sbr.rel (%p371) target = $region68
        $region67: #{tpu_custom_call.1} parent=47 // pred_region
          %374 = dma.done [#allocation11], 48
        $region68: #{tpu_custom_call.1} parent=47 // pred_fallthru
          _
        %s375 = sand.u32 %s50, 1
        %s376 = scalar_lea.sflag [#allocation5], %s375
        %s377 = sand.u32 %s50, 1
        %s378 = smul.addr %s377, 4
        %s379 = scalar_lea.vmem [#allocation4], %s378
        %p380 = pneg %p63
        %p381 = pneg %p60
        %s382 = sand.u32 %s28, 1
        %s383 = scalar_lea.sflag [#allocation8], %s382
        %s384 = sand.u32 %s76, 1
        %s385 = smul.addr %s384, 4
        %s386 = scalar_lea.vmem [#allocation7], %s385
        %p387 = pneg %p89
        %p388 = pneg %p86
        %s389 = sand.u32 %s28, 1
        %s390 = scalar_lea.sflag [#allocation8], %s389
        %s391 = sand.u32 %s102, 1
        %s392 = smul.addr %s391, 4
        %s393 = scalar_lea.vmem [#allocation9], %s392
        %p394 = pneg %p115
        %p395 = pneg %p112
        %p396 = pneg %p136
        %p397 = pneg %p133
        %p398 = pneg %p157
        %p399 = pneg %p154
        %p400 = pneg %p178
        %p401 = pneg %p175
        %p402 = pneg %p199
        %p403 = pneg %p196
        %p404 = pneg %p227
        %p405 = pneg %p224
        %s406 = sand.u32 %s214, 1
        %s407 = scalar_lea.sflag [#allocation6], %s406
        %s408 = sand.u32 %s214, 1
        %s409 = smul.addr %s408, 8
        %s410 = scalar_lea.vmem [#allocation13], %s409
        %p412 = scmp.eq.s32.totalorder %s33, 0
        // Predicated region
        $region69: #{tpu_custom_call.1} parent=47 // pred_check
          %p413 = pneg %p412
        $region70: #{tpu_custom_call.1} parent=47 // pred_check_branch
          %415 = sbr.rel (%p413) target = $region72
        $region71: #{tpu_custom_call.1} parent=47 // pred_region
          %v416 = vld [vmem:[%s353] sm:$0xf]
          %s417 = scalar_lea.vmem [#allocation10], 16
          %v418 = vld [vmem:[%s417] sm:$0xf]
          %v419 = vld [vmem:[%s417 + $0x4] sm:$0xf]
          %v420 = vld [vmem:[%s417 + $0x8] sm:$0xf]
          %v421 = vld [vmem:[%s417 + $0xc] sm:$0xf]
          %s422 = scalar_lea.vmem [#allocation12], 1
          %v423 = vld [vmem:[%s422] sm:$0x1]
          %v425 = vlaneseq
          %v426 = vshrl.u32 %v425, 7
          %v427 = vsub.s32 0, %v426
          %v428 = vrot.slane %v423, %v427
          %v434 = vunpack.c.l.b16 %v418
          %v435 = vunpack.c.l.b16 %v419
          %v436 = vunpack.c.l.b16 %v420
          %v437 = vunpack.c.l.b16 %v421
          %v438 = vpack.c.b16 %v435, %v434
          %v439 = vpack.c.b16 %v437, %v436
          %vm442 = vcmask 261120
          %v444 = vsel %vm442, %v416, 0
          %446 = vmatprep.subr.bf16.mxu0 0
          %447 = vmatpush1.bf16.msra.mxu0 %v438
          %448 = vmatprep.subr.bf16.mxu0 0
          %449 = vmatpush1.bf16.msra.mxu0 %v439
          %450 = vmatprep.subr.bf16.mxu0 0
          %451 = vmatpush1.bf16.msra.mxu0 0
          %452 = vmatprep.subr.bf16.mxu0 0
          %453 = vmatpush1.bf16.msra.mxu0 0
          %454 = vmatprep.subr.bf16.mxu0 0
          %455 = vmatpush1.bf16.msra.mxu0 0
          %456 = vmatprep.subr.bf16.mxu0 0
          %457 = vmatpush1.bf16.msra.mxu0 0
          %458 = vmatprep.subr.bf16.mxu0 0
          %459 = vmatpush1.bf16.msra.mxu0 0
          %460 = vmatprep.subr.bf16.mxu0 0
          %461 = vmatpush1.bf16.msra.mxu0 0
          %462 = vmatprep.subr.bf16.mxu0 0
          %463 = vmatpush1.bf16.msra.mxu0 0
          %464 = vmatprep.subr.bf16.mxu0 0
          %465 = vmatpush1.bf16.msra.mxu0 0
          %466 = vmatprep.subr.bf16.mxu0 0
          %467 = vmatpush1.bf16.msra.mxu0 0
          %468 = vmatprep.subr.bf16.mxu0 0
          %469 = vmatpush1.bf16.msra.mxu0 0
          %470 = vmatprep.subr.bf16.mxu0 0
          %471 = vmatpush1.bf16.msra.mxu0 0
          %472 = vmatprep.subr.bf16.mxu0 0
          %473 = vmatpush1.bf16.msra.mxu0 0
          %474 = vmatprep.subr.bf16.mxu0 0
          %475 = vmatpush1.bf16.msra.mxu0 0
          %476 = vmatprep.subr.bf16.mxu0 0
          %477 = vmatpush1.bf16.msra.mxu0 0
          %478 = vmatprep.mubr.bf16.mxu0 0
          %479 = vmatmul.mubr.bf16.gmra.mrb[0].mxu0 %v444
          %v480 = vpop.f32.mrb[0].mxu0
          %v481 = vadd.f32 %v428, %v480
          %v482 = vpop.f32.mrb[0].mxu0
          %v483 = vpop.f32.mrb[0].mxu0
          %v484 = vpop.f32.mrb[0].mxu0
          %485 = vdwg.mxu0
          %v486 = vld [vmem:[%s362] sm:$0xf]
          %s487 = scalar_lea.vmem [#allocation10], 32
          %v488 = vld [vmem:[%s487] sm:$0xf]
          %v489 = vld [vmem:[%s487 + $0x4] sm:$0xf]
          %v490 = vld [vmem:[%s487 + $0x8] sm:$0xf]
          %v491 = vld [vmem:[%s487 + $0xc] sm:$0xf]
          %s492 = scalar_lea.vmem [#allocation12], 2
          %v493 = vld [vmem:[%s492] sm:$0x1]
          %v495 = vlaneseq
          %v496 = vshrl.u32 %v495, 7
          %v497 = vsub.s32 0, %v496
          %v498 = vrot.slane %v493, %v497
          %v504 = vunpack.c.l.b16 %v488
          %v505 = vunpack.c.l.b16 %v489
          %v506 = vunpack.c.l.b16 %v490
          %v507 = vunpack.c.l.b16 %v491
          %v508 = vpack.c.b16 %v505, %v504
          %v509 = vpack.c.b16 %v507, %v506
          %v513 = vsel %vm442, %v486, 0
          %515 = vmatprep.subr.bf16.mxu0 0
          %516 = vmatpush1.bf16.msra.mxu0 %v508
          %517 = vmatprep.subr.bf16.mxu0 0
          %518 = vmatpush1.bf16.msra.mxu0 %v509
          %519 = vmatprep.subr.bf16.mxu0 0
          %520 = vmatpush1.bf16.msra.mxu0 0
          %521 = vmatprep.subr.bf16.mxu0 0
          %522 = vmatpush1.bf16.msra.mxu0 0
          %523 = vmatprep.subr.bf16.mxu0 0
          %524 = vmatpush1.bf16.msra.mxu0 0
          %525 = vmatprep.subr.bf16.mxu0 0
          %526 = vmatpush1.bf16.msra.mxu0 0
          %527 = vmatprep.subr.bf16.mxu0 0
          %528 = vmatpush1.bf16.msra.mxu0 0
          %529 = vmatprep.subr.bf16.mxu0 0
          %530 = vmatpush1.bf16.msra.mxu0 0
          %531 = vmatprep.subr.bf16.mxu0 0
          %532 = vmatpush1.bf16.msra.mxu0 0
          %533 = vmatprep.subr.bf16.mxu0 0
          %534 = vmatpush1.bf16.msra.mxu0 0
          %535 = vmatprep.subr.bf16.mxu0 0
          %536 = vmatpush1.bf16.msra.mxu0 0
          %537 = vmatprep.subr.bf16.mxu0 0
          %538 = vmatpush1.bf16.msra.mxu0 0
          %539 = vmatprep.subr.bf16.mxu0 0
          %540 = vmatpush1.bf16.msra.mxu0 0
          %541 = vmatprep.subr.bf16.mxu0 0
          %542 = vmatpush1.bf16.msra.mxu0 0
          %543 = vmatprep.subr.bf16.mxu0 0
          %544 = vmatpush1.bf16.msra.mxu0 0
          %545 = vmatprep.subr.bf16.mxu0 0
          %546 = vmatpush1.bf16.msra.mxu0 0
          %547 = vmatprep.mubr.bf16.mxu0 0
          %548 = vmatmul.mubr.bf16.gmra.mrb[0].mxu0 %v513
          %v549 = vpop.f32.mrb[0].mxu0
          %v550 = vadd.f32 %v498, %v549
          %v551 = vpop.f32.mrb[0].mxu0
          %v552 = vpop.f32.mrb[0].mxu0
          %v553 = vpop.f32.mrb[0].mxu0
          %554 = vdwg.mxu0
          %v555 = vpack.c.bf16 %v481, %v481
          %vm556 = vcmask 257024
          %557 = vst.msk [vmem:[#allocation2] sm:$0xf] %vm556, %v555
          %v558 = vpack.c.bf16 %v550, %v550
          %559 = vst.msk [vmem:[#allocation3] sm:$0xf] %vm556, %v558
        $region72: #{tpu_custom_call.1} parent=47 // pred_fallthru
          _
        %v560 = vld [vmem:[%s344] sm:$0xf]
        %v561 = vld [vmem:[#allocation10] sm:$0xf]
        %v562 = vld [vmem:[#allocation10 + $0x4] sm:$0xf]
        %v563 = vld [vmem:[#allocation10 + $0x8] sm:$0xf]
        %v564 = vld [vmem:[#allocation10 + $0xc] sm:$0xf]
        %v565 = vld [vmem:[#allocation12] sm:$0x1]
        %v567 = vlaneseq
        %v568 = vshrl.u32 %v567, 7
        %v569 = vsub.s32 0, %v568
        %v570 = vrot.slane %v565, %v569
        %v576 = vunpack.c.l.b16 %v561
        %v577 = vunpack.c.l.b16 %v562
        %v578 = vunpack.c.l.b16 %v563
        %v579 = vunpack.c.l.b16 %v564
        %v580 = vpack.c.b16 %v577, %v576
        %v581 = vpack.c.b16 %v579, %v578
        %vm584 = vcmask 261120
        %v586 = vsel %vm584, %v560, 0
        %588 = vmatprep.subr.bf16.mxu0 0
        %589 = vmatpush1.bf16.msra.mxu0 %v580
        %590 = vmatprep.subr.bf16.mxu0 0
        %591 = vmatpush1.bf16.msra.mxu0 %v581
        %592 = vmatprep.subr.bf16.mxu0 0
        %593 = vmatpush1.bf16.msra.mxu0 0
        %594 = vmatprep.subr.bf16.mxu0 0
        %595 = vmatpush1.bf16.msra.mxu0 0
        %596 = vmatprep.subr.bf16.mxu0 0
        %597 = vmatpush1.bf16.msra.mxu0 0
        %598 = vmatprep.subr.bf16.mxu0 0
        %599 = vmatpush1.bf16.msra.mxu0 0
        %600 = vmatprep.subr.bf16.mxu0 0
        %601 = vmatpush1.bf16.msra.mxu0 0
        %602 = vmatprep.subr.bf16.mxu0 0
        %603 = vmatpush1.bf16.msra.mxu0 0
        %604 = vmatprep.subr.bf16.mxu0 0
        %605 = vmatpush1.bf16.msra.mxu0 0
        %606 = vmatprep.subr.bf16.mxu0 0
        %607 = vmatpush1.bf16.msra.mxu0 0
        %608 = vmatprep.subr.bf16.mxu0 0
        %609 = vmatpush1.bf16.msra.mxu0 0
        %610 = vmatprep.subr.bf16.mxu0 0
        %611 = vmatpush1.bf16.msra.mxu0 0
        %612 = vmatprep.subr.bf16.mxu0 0
        %613 = vmatpush1.bf16.msra.mxu0 0
        %614 = vmatprep.subr.bf16.mxu0 0
        %615 = vmatpush1.bf16.msra.mxu0 0
        %616 = vmatprep.subr.bf16.mxu0 0
        %617 = vmatpush1.bf16.msra.mxu0 0
        %618 = vmatprep.subr.bf16.mxu0 0
        %619 = vmatpush1.bf16.msra.mxu0 0
        %620 = vmatprep.mubr.bf16.mxu0 0
        %621 = vmatmul.mubr.bf16.gmra.mrb[0].mxu0 %v586
        %v622 = vpop.f32.mrb[0].mxu0
        %v623 = vadd.f32 %v570, %v622
        %v624 = vpop.f32.mrb[0].mxu0
        %v625 = vpop.f32.mrb[0].mxu0
        %v626 = vpop.f32.mrb[0].mxu0
        %627 = vdwg.mxu0
        %629 = vrot.lane.b32.xlu0 %v623, 120
        %v630 = vpop.permute.xlu0 %629
        %632 = vrot.lane.b32.xlu0 %v623, 112
        %v633 = vpop.permute.xlu0 %632
        %635 = vrot.lane.b32.xlu0 %v623, 104
        %v636 = vpop.permute.xlu0 %635
        %v638 = vcombine.low %v623, %v633
        %v639 = vcombine.high %v623, %v633
        %v641 = vunpack.c.l.s4 1983009808
        %v642 = vunpack.c.0.s8 %v641
        %v643 = vlaneseq
        %v644 = vshrl.u32 %v643, 7
        %v645 = vsub.s32 %v642, %v644
        %v646 = vrot.slane %v638, %v645
        %v648 = vunpack.c.l.s4 1983009808
        %v649 = vunpack.c.0.s8 %v648
        %v650 = vlaneseq
        %v651 = vshrl.u32 %v650, 7
        %v652 = vsub.s32 %v649, %v651
        %v653 = vrot.slane %v639, %v652
        %v654 = vcombine.low %v630, %v636
        %v655 = vcombine.high %v630, %v636
        %v657 = vunpack.c.l.s4 1983009808
        %v658 = vunpack.c.0.s8 %v657
        %v659 = vlaneseq
        %v660 = vshrl.u32 %v659, 7
        %v661 = vsub.s32 %v658, %v660
        %v662 = vrot.slane %v654, %v661
        %v664 = vunpack.c.l.s4 1983009808
        %v665 = vunpack.c.0.s8 %v664
        %v666 = vlaneseq
        %v667 = vshrl.u32 %v666, 7
        %v668 = vsub.s32 %v665, %v667
        %v669 = vrot.slane %v655, %v668
        %v670 = vcombine.low %v646, %v662
        %v671 = vcombine.high %v646, %v662
        %v673 = vunpack.c.l.s4 1934713408
        %v674 = vunpack.c.0.s8 %v673
        %v675 = vlaneseq
        %v676 = vshrl.u32 %v675, 7
        %v677 = vsub.s32 %v674, %v676
        %v678 = vrot.slane %v670, %v677
        %v680 = vunpack.c.l.s4 1934713408
        %v681 = vunpack.c.0.s8 %v680
        %v682 = vlaneseq
        %v683 = vshrl.u32 %v682, 7
        %v684 = vsub.s32 %v681, %v683
        %v685 = vrot.slane %v671, %v684
        %v686 = vcombine.low %v653, %v669
        %v687 = vcombine.high %v653, %v669
        %v689 = vunpack.c.l.s4 1934713408
        %v690 = vunpack.c.0.s8 %v689
        %v691 = vlaneseq
        %v692 = vshrl.u32 %v691, 7
        %v693 = vsub.s32 %v690, %v692
        %v694 = vrot.slane %v686, %v693
        %v696 = vunpack.c.l.s4 1934713408
        %v697 = vunpack.c.0.s8 %v696
        %v698 = vlaneseq
        %v699 = vshrl.u32 %v698, 7
        %v700 = vsub.s32 %v697, %v699
        %v701 = vrot.slane %v687, %v700
        %v702 = vcombine.high %v678, 0.0
        %v703 = vcombine.high %v685, 0.0
        %v704 = vcombine.high %v694, 0.0
        %v705 = vcombine.high %v701, 0.0
        %v706 = vcombine.low %v678, %v685
        %v708 = vunpack.c.l.s4 1983009808
        %v709 = vunpack.c.0.s8 %v708
        %v710 = vlaneseq
        %v711 = vshrl.u32 %v710, 7
        %v712 = vsub.s32 %v709, %v711
        %v713 = vrot.slane %v706, %v712
        %v714 = vcombine.low %v702, %v703
        %v716 = vunpack.c.l.s4 1983009808
        %v717 = vunpack.c.0.s8 %v716
        %v718 = vlaneseq
        %v719 = vshrl.u32 %v718, 7
        %v720 = vsub.s32 %v717, %v719
        %v721 = vrot.slane %v714, %v720
        %v722 = vcombine.low %v694, %v701
        %v724 = vunpack.c.l.s4 1983009808
        %v725 = vunpack.c.0.s8 %v724
        %v726 = vlaneseq
        %v727 = vshrl.u32 %v726, 7
        %v728 = vsub.s32 %v725, %v727
        %v729 = vrot.slane %v722, %v728
        %v730 = vcombine.low %v704, %v705
        %v732 = vunpack.c.l.s4 1983009808
        %v733 = vunpack.c.0.s8 %v732
        %v734 = vlaneseq
        %v735 = vshrl.u32 %v734, 7
        %v736 = vsub.s32 %v733, %v735
        %v737 = vrot.slane %v730, %v736
        %v738 = vcombine.low %v713, %v721
        %v739 = vcombine.high %v713, %v721
        %v741 = vunpack.c.l.s4 1934713408
        %v742 = vunpack.c.0.s8 %v741
        %v743 = vlaneseq
        %v744 = vshrl.u32 %v743, 7
        %v745 = vsub.s32 %v742, %v744
        %v746 = vrot.slane %v738, %v745
        %v748 = vunpack.c.l.s4 1934713408
        %v749 = vunpack.c.0.s8 %v748
        %v750 = vlaneseq
        %v751 = vshrl.u32 %v750, 7
        %v752 = vsub.s32 %v749, %v751
        %v753 = vrot.slane %v739, %v752
        %v754 = vcombine.low %v729, %v737
        %v755 = vcombine.high %v729, %v737
        %v757 = vunpack.c.l.s4 1934713408
        %v758 = vunpack.c.0.s8 %v757
        %v759 = vlaneseq
        %v760 = vshrl.u32 %v759, 7
        %v761 = vsub.s32 %v758, %v760
        %v762 = vrot.slane %v754, %v761
        %v764 = vunpack.c.l.s4 1934713408
        %v765 = vunpack.c.0.s8 %v764
        %v766 = vlaneseq
        %v767 = vshrl.u32 %v766, 7
        %v768 = vsub.s32 %v765, %v767
        %v769 = vrot.slane %v755, %v768
        %v770 = vcombine.low %v746, %v762
        %v771 = vcombine.high %v746, %v762
        %v772 = vcombine.low %v753, %v769
        %v773 = vcombine.high %v753, %v769
        %v774 = vpack.c.bf16 %v770, %v770
        %v775 = vpack.c.bf16 %v771, %v771
        %v776 = vpack.c.bf16 %v772, %v772
        %v777 = vpack.c.bf16 %v773, %v773
        %v778 = vld [vmem:[#allocation2] sm:$0xf]
        %780 = vrot.lane.b32.xlu0 %v778, 120
        %v781 = vpop.permute.xlu0 %780
        %782 = vrot.lane.b32.xlu0 %v778, 112
        %v783 = vpop.permute.xlu0 %782
        %784 = vrot.lane.b32.xlu0 %v778, 104
        %v785 = vpop.permute.xlu0 %784
        %v788 = vpack.i.b16 %v781, %v778
        %v789 = vshrl.u32 %v778, 16
        %v790 = vshrl.u32 %v781, 16
        %v791 = vpack.i.b16 %v790, %v789
        %v794 = vpack.i.b16 %v785, %v783
        %v795 = vshrl.u32 %v783, 16
        %v796 = vshrl.u32 %v785, 16
        %v797 = vpack.i.b16 %v796, %v795
        %v800 = vunpack.c.l.s4 1983009808
        %v801 = vunpack.c.0.s8 %v800
        %v802 = vlaneseq
        %v803 = vshrl.u32 %v802, 7
        %v804 = vsub.s32 %v801, %v803
        %v805 = vrot.slane %v788, %v804
        %v808 = vunpack.c.l.s4 1983009808
        %v809 = vunpack.c.0.s8 %v808
        %v810 = vlaneseq
        %v811 = vshrl.u32 %v810, 7
        %v812 = vsub.s32 %v809, %v811
        %v813 = vrot.slane %v794, %v812
        %v814 = vcombine.low %v805, %v813
        %v815 = vcombine.high %v805, %v813
        %v817 = vunpack.c.l.s4 1934713408
        %v818 = vunpack.c.0.s8 %v817
        %v819 = vlaneseq
        %v820 = vshrl.u32 %v819, 7
        %v821 = vsub.s32 %v818, %v820
        %v822 = vrot.slane %v814, %v821
        %v824 = vunpack.c.l.s4 1934713408
        %v825 = vunpack.c.0.s8 %v824
        %v826 = vlaneseq
        %v827 = vshrl.u32 %v826, 7
        %v828 = vsub.s32 %v825, %v827
        %v829 = vrot.slane %v815, %v828
        %v830 = vcombine.high %v822, 0
        %v831 = vcombine.high %v829, 0
        %v834 = vunpack.c.l.s4 1983009808
        %v835 = vunpack.c.0.s8 %v834
        %v836 = vlaneseq
        %v837 = vshrl.u32 %v836, 7
        %v838 = vsub.s32 %v835, %v837
        %v839 = vrot.slane %v791, %v838
        %v842 = vunpack.c.l.s4 1983009808
        %v843 = vunpack.c.0.s8 %v842
        %v844 = vlaneseq
        %v845 = vshrl.u32 %v844, 7
        %v846 = vsub.s32 %v843, %v845
        %v847 = vrot.slane %v797, %v846
        %v848 = vcombine.low %v839, %v847
        %v849 = vcombine.high %v839, %v847
        %v851 = vunpack.c.l.s4 1934713408
        %v852 = vunpack.c.0.s8 %v851
        %v853 = vlaneseq
        %v854 = vshrl.u32 %v853, 7
        %v855 = vsub.s32 %v852, %v854
        %v856 = vrot.slane %v848, %v855
        %v858 = vunpack.c.l.s4 1934713408
        %v859 = vunpack.c.0.s8 %v858
        %v860 = vlaneseq
        %v861 = vshrl.u32 %v860, 7
        %v862 = vsub.s32 %v859, %v861
        %v863 = vrot.slane %v849, %v862
        %v864 = vcombine.high %v856, 0
        %v865 = vcombine.high %v863, 0
        %v866 = vcombine.low %v822, %v829
        %v868 = vunpack.c.l.s4 1983009808
        %v869 = vunpack.c.0.s8 %v868
        %v870 = vlaneseq
        %v871 = vshrl.u32 %v870, 7
        %v872 = vsub.s32 %v869, %v871
        %v873 = vrot.slane %v866, %v872
        %v874 = vcombine.low %v830, %v831
        %v876 = vunpack.c.l.s4 1983009808
        %v877 = vunpack.c.0.s8 %v876
        %v878 = vlaneseq
        %v879 = vshrl.u32 %v878, 7
        %v880 = vsub.s32 %v877, %v879
        %v881 = vrot.slane %v874, %v880
        %v882 = vcombine.low %v873, %v881
        %v884 = vunpack.c.l.s4 1934713408
        %v885 = vunpack.c.0.s8 %v884
        %v886 = vlaneseq
        %v887 = vshrl.u32 %v886, 7
        %v888 = vsub.s32 %v885, %v887
        %v889 = vrot.slane %v882, %v888
        %v890 = vcombine.high %v889, 0
        %v891 = vcombine.low %v856, %v863
        %v893 = vunpack.c.l.s4 1983009808
        %v894 = vunpack.c.0.s8 %v893
        %v895 = vlaneseq
        %v896 = vshrl.u32 %v895, 7
        %v897 = vsub.s32 %v894, %v896
        %v898 = vrot.slane %v891, %v897
        %v899 = vcombine.low %v864, %v865
        %v901 = vunpack.c.l.s4 1983009808
        %v902 = vunpack.c.0.s8 %v901
        %v903 = vlaneseq
        %v904 = vshrl.u32 %v903, 7
        %v905 = vsub.s32 %v902, %v904
        %v906 = vrot.slane %v899, %v905
        %v907 = vcombine.low %v898, %v906
        %v909 = vunpack.c.l.s4 1934713408
        %v910 = vunpack.c.0.s8 %v909
        %v911 = vlaneseq
        %v912 = vshrl.u32 %v911, 7
        %v913 = vsub.s32 %v910, %v912
        %v914 = vrot.slane %v907, %v913
        %v915 = vcombine.high %v914, 0
        %v918 = vpack.i.b16 %v914, %v889
        %v919 = vshrl.u32 %v889, 16
        %v920 = vshrl.u32 %v914, 16
        %v921 = vpack.i.b16 %v920, %v919
        %v924 = vpack.i.b16 %v915, %v890
        %v925 = vshrl.u32 %v890, 16
        %v926 = vshrl.u32 %v915, 16
        %v927 = vpack.i.b16 %v926, %v925
        %v928 = vld [vmem:[#allocation3] sm:$0xf]
        %930 = vrot.lane.b32.xlu0 %v928, 120
        %v931 = vpop.permute.xlu0 %930
        %932 = vrot.lane.b32.xlu0 %v928, 112
        %v933 = vpop.permute.xlu0 %932
        %934 = vrot.lane.b32.xlu0 %v928, 104
        %v935 = vpop.permute.xlu0 %934
        %v938 = vpack.i.b16 %v931, %v928
        %v939 = vshrl.u32 %v928, 16
        %v940 = vshrl.u32 %v931, 16
        %v941 = vpack.i.b16 %v940, %v939
        %v944 = vpack.i.b16 %v935, %v933
        %v945 = vshrl.u32 %v933, 16
        %v946 = vshrl.u32 %v935, 16
        %v947 = vpack.i.b16 %v946, %v945
        %v950 = vunpack.c.l.s4 1983009808
        %v951 = vunpack.c.0.s8 %v950
        %v952 = vlaneseq
        %v953 = vshrl.u32 %v952, 7
        %v954 = vsub.s32 %v951, %v953
        %v955 = vrot.slane %v938, %v954
        %v958 = vunpack.c.l.s4 1983009808
        %v959 = vunpack.c.0.s8 %v958
        %v960 = vlaneseq
        %v961 = vshrl.u32 %v960, 7
        %v962 = vsub.s32 %v959, %v961
        %v963 = vrot.slane %v944, %v962
        %v964 = vcombine.low %v955, %v963
        %v965 = vcombine.high %v955, %v963
        %v967 = vunpack.c.l.s4 1934713408
        %v968 = vunpack.c.0.s8 %v967
        %v969 = vlaneseq
        %v970 = vshrl.u32 %v969, 7
        %v971 = vsub.s32 %v968, %v970
        %v972 = vrot.slane %v964, %v971
        %v974 = vunpack.c.l.s4 1934713408
        %v975 = vunpack.c.0.s8 %v974
        %v976 = vlaneseq
        %v977 = vshrl.u32 %v976, 7
        %v978 = vsub.s32 %v975, %v977
        %v979 = vrot.slane %v965, %v978
        %v980 = vcombine.high %v972, 0
        %v981 = vcombine.high %v979, 0
        %v984 = vunpack.c.l.s4 1983009808
        %v985 = vunpack.c.0.s8 %v984
        %v986 = vlaneseq
        %v987 = vshrl.u32 %v986, 7
        %v988 = vsub.s32 %v985, %v987
        %v989 = vrot.slane %v941, %v988
        %v992 = vunpack.c.l.s4 1983009808
        %v993 = vunpack.c.0.s8 %v992
        %v994 = vlaneseq
        %v995 = vshrl.u32 %v994, 7
        %v996 = vsub.s32 %v993, %v995
        %v997 = vrot.slane %v947, %v996
        %v998 = vcombine.low %v989, %v997
        %v999 = vcombine.high %v989, %v997
        %v1001 = vunpack.c.l.s4 1934713408
        %v1002 = vunpack.c.0.s8 %v1001
        %v1003 = vlaneseq
        %v1004 = vshrl.u32 %v1003, 7
        %v1005 = vsub.s32 %v1002, %v1004
        %v1006 = vrot.slane %v998, %v1005
        %v1008 = vunpack.c.l.s4 1934713408
        %v1009 = vunpack.c.0.s8 %v1008
        %v1010 = vlaneseq
        %v1011 = vshrl.u32 %v1010, 7
        %v1012 = vsub.s32 %v1009, %v1011
        %v1013 = vrot.slane %v999, %v1012
        %v1014 = vcombine.high %v1006, 0
        %v1015 = vcombine.high %v1013, 0
        %v1016 = vcombine.low %v972, %v979
        %v1018 = vunpack.c.l.s4 1983009808
        %v1019 = vunpack.c.0.s8 %v1018
        %v1020 = vlaneseq
        %v1021 = vshrl.u32 %v1020, 7
        %v1022 = vsub.s32 %v1019, %v1021
        %v1023 = vrot.slane %v1016, %v1022
        %v1024 = vcombine.low %v980, %v981
        %v1026 = vunpack.c.l.s4 1983009808
        %v1027 = vunpack.c.0.s8 %v1026
        %v1028 = vlaneseq
        %v1029 = vshrl.u32 %v1028, 7
        %v1030 = vsub.s32 %v1027, %v1029
        %v1031 = vrot.slane %v1024, %v1030
        %v1032 = vcombine.low %v1023, %v1031
        %v1034 = vunpack.c.l.s4 1934713408
        %v1035 = vunpack.c.0.s8 %v1034
        %v1036 = vlaneseq
        %v1037 = vshrl.u32 %v1036, 7
        %v1038 = vsub.s32 %v1035, %v1037
        %v1039 = vrot.slane %v1032, %v1038
        %v1040 = vcombine.high %v1039, 0
        %v1041 = vcombine.low %v1006, %v1013
        %v1043 = vunpack.c.l.s4 1983009808
        %v1044 = vunpack.c.0.s8 %v1043
        %v1045 = vlaneseq
        %v1046 = vshrl.u32 %v1045, 7
        %v1047 = vsub.s32 %v1044, %v1046
        %v1048 = vrot.slane %v1041, %v1047
        %v1049 = vcombine.low %v1014, %v1015
        %v1051 = vunpack.c.l.s4 1983009808
        %v1052 = vunpack.c.0.s8 %v1051
        %v1053 = vlaneseq
        %v1054 = vshrl.u32 %v1053, 7
        %v1055 = vsub.s32 %v1052, %v1054
        %v1056 = vrot.slane %v1049, %v1055
        %v1057 = vcombine.low %v1048, %v1056
        %v1059 = vunpack.c.l.s4 1934713408
        %v1060 = vunpack.c.0.s8 %v1059
        %v1061 = vlaneseq
        %v1062 = vshrl.u32 %v1061, 7
        %v1063 = vsub.s32 %v1060, %v1062
        %v1064 = vrot.slane %v1057, %v1063
        %v1065 = vcombine.high %v1064, 0
        %v1068 = vpack.i.b16 %v1064, %v1039
        %v1069 = vshrl.u32 %v1039, 16
        %v1070 = vshrl.u32 %v1064, 16
        %v1071 = vpack.i.b16 %v1070, %v1069
        %v1074 = vpack.i.b16 %v1065, %v1040
        %v1075 = vshrl.u32 %v1040, 16
        %v1076 = vshrl.u32 %v1065, 16
        %v1077 = vpack.i.b16 %v1076, %v1075
        %vm1078 = vcmask 64512
        %v1080 = vsel %vm1078, %v774, 0
        %v1083 = vsel %vm1078, %v918, 0
        %1085 = vmatprep.subr.bf16.mxu0 0
        %1086 = vmatpush1.bf16.xpose.msra.mxu0 %v1083
        %1087 = vmatprep.subr.bf16.mxu0 0
        %1088 = vmatpush1.bf16.xpose.msra.mxu0 0
        %1089 = vmatprep.subr.bf16.mxu0 0
        %1090 = vmatpush1.bf16.xpose.msra.mxu0 0
        %1091 = vmatprep.subr.bf16.mxu0 0
        %1092 = vmatpush1.bf16.xpose.msra.mxu0 0
        %1093 = vmatprep.subr.bf16.mxu0 0
        %1094 = vmatpush1.bf16.xpose.msra.mxu0 0
        %1095 = vmatprep.subr.bf16.mxu0 0
        %1096 = vmatpush1.bf16.xpose.msra.mxu0 0
        %1097 = vmatprep.subr.bf16.mxu0 0
        %1098 = vmatpush1.bf16.xpose.msra.mxu0 0
        %1099 = vmatprep.subr.bf16.mxu0 0
        %1100 = vmatpush1.bf16.xpose.msra.mxu0 0
        %1101 = vmatprep.subr.bf16.mxu0 0
        %1102 = vmatpush1.bf16.xpose.msra.mxu0 0
        %1103 = vmatprep.subr.bf16.mxu0 0
        %1104 = vmatpush1.bf16.xpose.msra.mxu0 0
        %1105 = vmatprep.subr.bf16.mxu0 0
        %1106 = vmatpush1.bf16.xpose.msra.mxu0 0
        %1107 = vmatprep.subr.bf16.mxu0 0
        %1108 = vmatpush1.bf16.xpose.msra.mxu0 0
        %1109 = vmatprep.subr.bf16.mxu0 0
        %1110 = vmatpush1.bf16.xpose.msra.mxu0 0
        %1111 = vmatprep.subr.bf16.mxu0 0
        %1112 = vmatpush1.bf16.xpose.msra.mxu0 0
        %1113 = vmatprep.subr.bf16.mxu0 0
        %1114 = vmatpush1.bf16.xpose.msra.mxu0 0
        %1115 = vmatprep.subr.bf16.mxu0 0
        %1116 = vmatpush1.bf16.xpose.msra.mxu0 0
        %1117 = vmatprep.mubr.bf16.mxu0 0
        %1118 = vmatmul.mubr.bf16.gmra.mrb[0].mxu0 %v1080
        %v1119 = vpop.f32.mrb[0].mxu0
        %v1120 = vadd.f32 0.0, %v1119
        %v1121 = vpop.f32.mrb[0].mxu0
        %v1122 = vpop.f32.mrb[0].mxu0
        %v1123 = vpop.f32.mrb[0].mxu0
        %1124 = vdwg.mxu0
        %v1126 = vsel %vm1078, %v775, 0
        %v1129 = vsel %vm1078, %v921, 0
        %1131 = vmatprep.subr.bf16.mxu0 0
        %1132 = vmatpush1.bf16.xpose.msra.mxu0 %v1129
        %1133 = vmatprep.subr.bf16.mxu0 0
        %1134 = vmatpush1.bf16.xpose.msra.mxu0 0
        %1135 = vmatprep.subr.bf16.mxu0 0
        %1136 = vmatpush1.bf16.xpose.msra.mxu0 0
        %1137 = vmatprep.subr.bf16.mxu0 0
        %1138 = vmatpush1.bf16.xpose.msra.mxu0 0
        %1139 = vmatprep.subr.bf16.mxu0 0
        %1140 = vmatpush1.bf16.xpose.msra.mxu0 0
        %1141 = vmatprep.subr.bf16.mxu0 0
        %1142 = vmatpush1.bf16.xpose.msra.mxu0 0
        %1143 = vmatprep.subr.bf16.mxu0 0
        %1144 = vmatpush1.bf16.xpose.msra.mxu0 0
        %1145 = vmatprep.subr.bf16.mxu0 0
        %1146 = vmatpush1.bf16.xpose.msra.mxu0 0
        %1147 = vmatprep.subr.bf16.mxu0 0
        %1148 = vmatpush1.bf16.xpose.msra.mxu0 0
        %1149 = vmatprep.subr.bf16.mxu0 0
        %1150 = vmatpush1.bf16.xpose.msra.mxu0 0
        %1151 = vmatprep.subr.bf16.mxu0 0
        %1152 = vmatpush1.bf16.xpose.msra.mxu0 0
        %1153 = vmatprep.subr.bf16.mxu0 0
        %1154 = vmatpush1.bf16.xpose.msra.mxu0 0
        %1155 = vmatprep.subr.bf16.mxu0 0
        %1156 = vmatpush1.bf16.xpose.msra.mxu0 0
        %1157 = vmatprep.subr.bf16.mxu0 0
        %1158 = vmatpush1.bf16.xpose.msra.mxu0 0
        %1159 = vmatprep.subr.bf16.mxu0 0
        %1160 = vmatpush1.bf16.xpose.msra.mxu0 0
        %1161 = vmatprep.subr.bf16.mxu0 0
        %1162 = vmatpush1.bf16.xpose.msra.mxu0 0
        %1163 = vmatprep.mubr.bf16.mxu0 0
        %1164 = vmatmul.mubr.bf16.gmra.mrb[0].mxu0 %v1126
        %v1165 = vpop.f32.mrb[0].mxu0
        %v1166 = vadd.f32 0.0, %v1165
        %v1167 = vpop.f32.mrb[0].mxu0
        %v1168 = vpop.f32.mrb[0].mxu0
        %v1169 = vpop.f32.mrb[0].mxu0
        %1170 = vdwg.mxu0
        %v1172 = vsel %vm1078, %v776, 0
        %v1175 = vsel %vm1078, %v924, 0
        %1177 = vmatprep.subr.bf16.mxu0 0
        %1178 = vmatpush1.bf16.xpose.msra.mxu0 %v1175
        %1179 = vmatprep.subr.bf16.mxu0 0
        %1180 = vmatpush1.bf16.xpose.msra.mxu0 0
        %1181 = vmatprep.subr.bf16.mxu0 0
        %1182 = vmatpush1.bf16.xpose.msra.mxu0 0
        %1183 = vmatprep.subr.bf16.mxu0 0
        %1184 = vmatpush1.bf16.xpose.msra.mxu0 0
        %1185 = vmatprep.subr.bf16.mxu0 0
        %1186 = vmatpush1.bf16.xpose.msra.mxu0 0
        %1187 = vmatprep.subr.bf16.mxu0 0
        %1188 = vmatpush1.bf16.xpose.msra.mxu0 0
        %1189 = vmatprep.subr.bf16.mxu0 0
        %1190 = vmatpush1.bf16.xpose.msra.mxu0 0
        %1191 = vmatprep.subr.bf16.mxu0 0
        %1192 = vmatpush1.bf16.xpose.msra.mxu0 0
        %1193 = vmatprep.subr.bf16.mxu0 0
        %1194 = vmatpush1.bf16.xpose.msra.mxu0 0
        %1195 = vmatprep.subr.bf16.mxu0 0
        %1196 = vmatpush1.bf16.xpose.msra.mxu0 0
        %1197 = vmatprep.subr.bf16.mxu0 0
        %1198 = vmatpush1.bf16.xpose.msra.mxu0 0
        %1199 = vmatprep.subr.bf16.mxu0 0
        %1200 = vmatpush1.bf16.xpose.msra.mxu0 0
        %1201 = vmatprep.subr.bf16.mxu0 0
        %1202 = vmatpush1.bf16.xpose.msra.mxu0 0
        %1203 = vmatprep.subr.bf16.mxu0 0
        %1204 = vmatpush1.bf16.xpose.msra.mxu0 0
        %1205 = vmatprep.subr.bf16.mxu0 0
        %1206 = vmatpush1.bf16.xpose.msra.mxu0 0
        %1207 = vmatprep.subr.bf16.mxu0 0
        %1208 = vmatpush1.bf16.xpose.msra.mxu0 0
        %1209 = vmatprep.mubr.bf16.mxu0 0
        %1210 = vmatmul.mubr.bf16.gmra.mrb[0].mxu0 %v1172
        %v1211 = vpop.f32.mrb[0].mxu0
        %v1212 = vadd.f32 0.0, %v1211
        %v1213 = vpop.f32.mrb[0].mxu0
        %v1214 = vpop.f32.mrb[0].mxu0
        %v1215 = vpop.f32.mrb[0].mxu0
        %1216 = vdwg.mxu0
        %v1218 = vsel %vm1078, %v777, 0
        %v1221 = vsel %vm1078, %v927, 0
        %1223 = vmatprep.subr.bf16.mxu0 0
        %1224 = vmatpush1.bf16.xpose.msra.mxu0 %v1221
        %1225 = vmatprep.subr.bf16.mxu0 0
        %1226 = vmatpush1.bf16.xpose.msra.mxu0 0
        %1227 = vmatprep.subr.bf16.mxu0 0
        %1228 = vmatpush1.bf16.xpose.msra.mxu0 0
        %1229 = vmatprep.subr.bf16.mxu0 0
        %1230 = vmatpush1.bf16.xpose.msra.mxu0 0
        %1231 = vmatprep.subr.bf16.mxu0 0
        %1232 = vmatpush1.bf16.xpose.msra.mxu0 0
        %1233 = vmatprep.subr.bf16.mxu0 0
        %1234 = vmatpush1.bf16.xpose.msra.mxu0 0
        %1235 = vmatprep.subr.bf16.mxu0 0
        %1236 = vmatpush1.bf16.xpose.msra.mxu0 0
        %1237 = vmatprep.subr.bf16.mxu0 0
        %1238 = vmatpush1.bf16.xpose.msra.mxu0 0
        %1239 = vmatprep.subr.bf16.mxu0 0
        %1240 = vmatpush1.bf16.xpose.msra.mxu0 0
        %1241 = vmatprep.subr.bf16.mxu0 0
        %1242 = vmatpush1.bf16.xpose.msra.mxu0 0
        %1243 = vmatprep.subr.bf16.mxu0 0
        %1244 = vmatpush1.bf16.xpose.msra.mxu0 0
        %1245 = vmatprep.subr.bf16.mxu0 0
        %1246 = vmatpush1.bf16.xpose.msra.mxu0 0
        %1247 = vmatprep.subr.bf16.mxu0 0
        %1248 = vmatpush1.bf16.xpose.msra.mxu0 0
        %1249 = vmatprep.subr.bf16.mxu0 0
        %1250 = vmatpush1.bf16.xpose.msra.mxu0 0
        %1251 = vmatprep.subr.bf16.mxu0 0
        %1252 = vmatpush1.bf16.xpose.msra.mxu0 0
        %1253 = vmatprep.subr.bf16.mxu0 0
        %1254 = vmatpush1.bf16.xpose.msra.mxu0 0
        %1255 = vmatprep.mubr.bf16.mxu0 0
        %1256 = vmatmul.mubr.bf16.gmra.mrb[0].mxu0 %v1218
        %v1257 = vpop.f32.mrb[0].mxu0
        %v1258 = vadd.f32 0.0, %v1257
        %v1259 = vpop.f32.mrb[0].mxu0
        %v1260 = vpop.f32.mrb[0].mxu0
        %v1261 = vpop.f32.mrb[0].mxu0
        %1262 = vdwg.mxu0
        %v1263 = vsel %vm1078, %v1120, -inf
        %1264 = vmax.xlane.f32.xlu0 %v1263
        %v1265 = vpop.xlane.xlu0 %1264
        %v1266 = vsel %vm1078, %v1166, -inf
        %1267 = vmax.xlane.f32.xlu0 %v1266
        %v1268 = vpop.xlane.xlu0 %1267
        %v1269 = vsel %vm1078, %v1212, -inf
        %1270 = vmax.xlane.f32.xlu0 %v1269
        %v1271 = vpop.xlane.xlu0 %1270
        %v1272 = vsel %vm1078, %v1258, -inf
        %1273 = vmax.xlane.f32.xlu0 %v1272
        %v1274 = vpop.xlane.xlu0 %1273
        %v1275 = vsub.f32 %v1120, %v1265
        %v1276 = vsub.f32 %v1166, %v1268
        %v1277 = vsub.f32 %v1212, %v1271
        %v1278 = vsub.f32 %v1258, %v1274
        %v1279 = vmul.f32 %v1275, 1.442695
        %v1280 = vpow.pop %v1279
        %v1281 = vmul.f32 %v1276, 1.442695
        %v1282 = vpow.pop %v1281
        %v1283 = vmul.f32 %v1277, 1.442695
        %v1284 = vpow.pop %v1283
        %v1285 = vmul.f32 %v1278, 1.442695
        %v1286 = vpow.pop %v1285
        %v1287 = vsel %vm1078, %v1280, 0.0
        %1288 = vadd.xlane.f32.xlu0 %v1287
        %v1289 = vpop.xlane.xlu0 %1288
        %v1290 = vsel %vm1078, %v1282, 0.0
        %1291 = vadd.xlane.f32.xlu0 %v1290
        %v1292 = vpop.xlane.xlu0 %1291
        %v1293 = vsel %vm1078, %v1284, 0.0
        %1294 = vadd.xlane.f32.xlu0 %v1293
        %v1295 = vpop.xlane.xlu0 %1294
        %v1296 = vsel %vm1078, %v1286, 0.0
        %1297 = vadd.xlane.f32.xlu0 %v1296
        %v1298 = vpop.xlane.xlu0 %1297
        %v1299 = vrcp.pop %v1289
        %v1300 = vrcp.pop %v1292
        %v1301 = vrcp.pop %v1295
        %v1302 = vrcp.pop %v1298
        %v1303 = vmul.f32 %v1280, %v1299
        %v1304 = vmul.f32 %v1282, %v1300
        %v1305 = vmul.f32 %v1284, %v1301
        %v1306 = vmul.f32 %v1286, %v1302
        %v1307 = vpack.c.bf16 %v1303, %v1303
        %v1308 = vpack.c.bf16 %v1304, %v1304
        %v1309 = vpack.c.bf16 %v1305, %v1305
        %v1310 = vpack.c.bf16 %v1306, %v1306
        %v1312 = vsel %vm1078, %v1307, 0
        %vm1314 = vcmask 1043456
        %v1316 = vsel %vm1314, %v1068, 0
        %1318 = vmatprep.subr.bf16.mxu0 0
        %1319 = vmatpush1.bf16.msra.mxu0 %v1316
        %1320 = vmatprep.subr.bf16.mxu0 0
        %1321 = vmatpush1.bf16.msra.mxu0 0
        %1322 = vmatprep.subr.bf16.mxu0 0
        %1323 = vmatpush1.bf16.msra.mxu0 0
        %1324 = vmatprep.subr.bf16.mxu0 0
        %1325 = vmatpush1.bf16.msra.mxu0 0
        %1326 = vmatprep.subr.bf16.mxu0 0
        %1327 = vmatpush1.bf16.msra.mxu0 0
        %1328 = vmatprep.subr.bf16.mxu0 0
        %1329 = vmatpush1.bf16.msra.mxu0 0
        %1330 = vmatprep.subr.bf16.mxu0 0
        %1331 = vmatpush1.bf16.msra.mxu0 0
        %1332 = vmatprep.subr.bf16.mxu0 0
        %1333 = vmatpush1.bf16.msra.mxu0 0
        %1334 = vmatprep.subr.bf16.mxu0 0
        %1335 = vmatpush1.bf16.msra.mxu0 0
        %1336 = vmatprep.subr.bf16.mxu0 0
        %1337 = vmatpush1.bf16.msra.mxu0 0
        %1338 = vmatprep.subr.bf16.mxu0 0
        %1339 = vmatpush1.bf16.msra.mxu0 0
        %1340 = vmatprep.subr.bf16.mxu0 0
        %1341 = vmatpush1.bf16.msra.mxu0 0
        %1342 = vmatprep.subr.bf16.mxu0 0
        %1343 = vmatpush1.bf16.msra.mxu0 0
        %1344 = vmatprep.subr.bf16.mxu0 0
        %1345 = vmatpush1.bf16.msra.mxu0 0
        %1346 = vmatprep.subr.bf16.mxu0 0
        %1347 = vmatpush1.bf16.msra.mxu0 0
        %1348 = vmatprep.subr.bf16.mxu0 0
        %1349 = vmatpush1.bf16.msra.mxu0 0
        %1350 = vmatprep.mubr.bf16.mxu0 0
        %1351 = vmatmul.mubr.bf16.gmra.mrb[0].mxu0 %v1312
        %v1352 = vpop.f32.mrb[0].mxu0
        %v1353 = vadd.f32 0.0, %v1352
        %v1354 = vpop.f32.mrb[0].mxu0
        %v1355 = vpop.f32.mrb[0].mxu0
        %v1356 = vpop.f32.mrb[0].mxu0
        %1357 = vdwg.mxu0
        %v1359 = vsel %vm1078, %v1308, 0
        %v1362 = vsel %vm1314, %v1071, 0
        %1364 = vmatprep.subr.bf16.mxu0 0
        %1365 = vmatpush1.bf16.msra.mxu0 %v1362
        %1366 = vmatprep.subr.bf16.mxu0 0
        %1367 = vmatpush1.bf16.msra.mxu0 0
        %1368 = vmatprep.subr.bf16.mxu0 0
        %1369 = vmatpush1.bf16.msra.mxu0 0
        %1370 = vmatprep.subr.bf16.mxu0 0
        %1371 = vmatpush1.bf16.msra.mxu0 0
        %1372 = vmatprep.subr.bf16.mxu0 0
        %1373 = vmatpush1.bf16.msra.mxu0 0
        %1374 = vmatprep.subr.bf16.mxu0 0
        %1375 = vmatpush1.bf16.msra.mxu0 0
        %1376 = vmatprep.subr.bf16.mxu0 0
        %1377 = vmatpush1.bf16.msra.mxu0 0
        %1378 = vmatprep.subr.bf16.mxu0 0
        %1379 = vmatpush1.bf16.msra.mxu0 0
        %1380 = vmatprep.subr.bf16.mxu0 0
        %1381 = vmatpush1.bf16.msra.mxu0 0
        %1382 = vmatprep.subr.bf16.mxu0 0
        %1383 = vmatpush1.bf16.msra.mxu0 0
        %1384 = vmatprep.subr.bf16.mxu0 0
        %1385 = vmatpush1.bf16.msra.mxu0 0
        %1386 = vmatprep.subr.bf16.mxu0 0
        %1387 = vmatpush1.bf16.msra.mxu0 0
        %1388 = vmatprep.subr.bf16.mxu0 0
        %1389 = vmatpush1.bf16.msra.mxu0 0
        %1390 = vmatprep.subr.bf16.mxu0 0
        %1391 = vmatpush1.bf16.msra.mxu0 0
        %1392 = vmatprep.subr.bf16.mxu0 0
        %1393 = vmatpush1.bf16.msra.mxu0 0
        %1394 = vmatprep.subr.bf16.mxu0 0
        %1395 = vmatpush1.bf16.msra.mxu0 0
        %1396 = vmatprep.mubr.bf16.mxu0 0
        %1397 = vmatmul.mubr.bf16.gmra.mrb[0].mxu0 %v1359
        %v1398 = vpop.f32.mrb[0].mxu0
        %v1399 = vadd.f32 0.0, %v1398
        %v1400 = vpop.f32.mrb[0].mxu0
        %v1401 = vpop.f32.mrb[0].mxu0
        %v1402 = vpop.f32.mrb[0].mxu0
        %1403 = vdwg.mxu0
        %v1405 = vsel %vm1078, %v1309, 0
        %v1408 = vsel %vm1314, %v1074, 0
        %1410 = vmatprep.subr.bf16.mxu0 0
        %1411 = vmatpush1.bf16.msra.mxu0 %v1408
        %1412 = vmatprep.subr.bf16.mxu0 0
        %1413 = vmatpush1.bf16.msra.mxu0 0
        %1414 = vmatprep.subr.bf16.mxu0 0
        %1415 = vmatpush1.bf16.msra.mxu0 0
        %1416 = vmatprep.subr.bf16.mxu0 0
        %1417 = vmatpush1.bf16.msra.mxu0 0
        %1418 = vmatprep.subr.bf16.mxu0 0
        %1419 = vmatpush1.bf16.msra.mxu0 0
        %1420 = vmatprep.subr.bf16.mxu0 0
        %1421 = vmatpush1.bf16.msra.mxu0 0
        %1422 = vmatprep.subr.bf16.mxu0 0
        %1423 = vmatpush1.bf16.msra.mxu0 0
        %1424 = vmatprep.subr.bf16.mxu0 0
        %1425 = vmatpush1.bf16.msra.mxu0 0
        %1426 = vmatprep.subr.bf16.mxu0 0
        %1427 = vmatpush1.bf16.msra.mxu0 0
        %1428 = vmatprep.subr.bf16.mxu0 0
        %1429 = vmatpush1.bf16.msra.mxu0 0
        %1430 = vmatprep.subr.bf16.mxu0 0
        %1431 = vmatpush1.bf16.msra.mxu0 0
        %1432 = vmatprep.subr.bf16.mxu0 0
        %1433 = vmatpush1.bf16.msra.mxu0 0
        %1434 = vmatprep.subr.bf16.mxu0 0
        %1435 = vmatpush1.bf16.msra.mxu0 0
        %1436 = vmatprep.subr.bf16.mxu0 0
        %1437 = vmatpush1.bf16.msra.mxu0 0
        %1438 = vmatprep.subr.bf16.mxu0 0
        %1439 = vmatpush1.bf16.msra.mxu0 0
        %1440 = vmatprep.subr.bf16.mxu0 0
        %1441 = vmatpush1.bf16.msra.mxu0 0
        %1442 = vmatprep.mubr.bf16.mxu0 0
        %1443 = vmatmul.mubr.bf16.gmra.mrb[0].mxu0 %v1405
        %v1444 = vpop.f32.mrb[0].mxu0
        %v1445 = vadd.f32 0.0, %v1444
        %v1446 = vpop.f32.mrb[0].mxu0
        %v1447 = vpop.f32.mrb[0].mxu0
        %v1448 = vpop.f32.mrb[0].mxu0
        %1449 = vdwg.mxu0
        %v1451 = vsel %vm1078, %v1310, 0
        %v1454 = vsel %vm1314, %v1077, 0
        %1456 = vmatprep.subr.bf16.mxu0 0
        %1457 = vmatpush1.bf16.msra.mxu0 %v1454
        %1458 = vmatprep.subr.bf16.mxu0 0
        %1459 = vmatpush1.bf16.msra.mxu0 0
        %1460 = vmatprep.subr.bf16.mxu0 0
        %1461 = vmatpush1.bf16.msra.mxu0 0
        %1462 = vmatprep.subr.bf16.mxu0 0
        %1463 = vmatpush1.bf16.msra.mxu0 0
        %1464 = vmatprep.subr.bf16.mxu0 0
        %1465 = vmatpush1.bf16.msra.mxu0 0
        %1466 = vmatprep.subr.bf16.mxu0 0
        %1467 = vmatpush1.bf16.msra.mxu0 0
        %1468 = vmatprep.subr.bf16.mxu0 0
        %1469 = vmatpush1.bf16.msra.mxu0 0
        %1470 = vmatprep.subr.bf16.mxu0 0
        %1471 = vmatpush1.bf16.msra.mxu0 0
        %1472 = vmatprep.subr.bf16.mxu0 0
        %1473 = vmatpush1.bf16.msra.mxu0 0
        %1474 = vmatprep.subr.bf16.mxu0 0
        %1475 = vmatpush1.bf16.msra.mxu0 0
        %1476 = vmatprep.subr.bf16.mxu0 0
        %1477 = vmatpush1.bf16.msra.mxu0 0
        %1478 = vmatprep.subr.bf16.mxu0 0
        %1479 = vmatpush1.bf16.msra.mxu0 0
        %1480 = vmatprep.subr.bf16.mxu0 0
        %1481 = vmatpush1.bf16.msra.mxu0 0
        %1482 = vmatprep.subr.bf16.mxu0 0
        %1483 = vmatpush1.bf16.msra.mxu0 0
        %1484 = vmatprep.subr.bf16.mxu0 0
        %1485 = vmatpush1.bf16.msra.mxu0 0
        %1486 = vmatprep.subr.bf16.mxu0 0
        %1487 = vmatpush1.bf16.msra.mxu0 0
        %1488 = vmatprep.mubr.bf16.mxu0 0
        %1489 = vmatmul.mubr.bf16.gmra.mrb[0].mxu0 %v1451
        %v1490 = vpop.f32.mrb[0].mxu0
        %v1491 = vadd.f32 0.0, %v1490
        %v1492 = vpop.f32.mrb[0].mxu0
        %v1493 = vpop.f32.mrb[0].mxu0
        %v1494 = vpop.f32.mrb[0].mxu0
        %1495 = vdwg.mxu0
        %v1496 = vcombine.low %v1353, %v1445
        %v1497 = vcombine.high %v1353, %v1445
        %v1499 = vunpack.c.l.s4 1983009808
        %v1500 = vunpack.c.0.s8 %v1499
        %v1501 = vlaneseq
        %v1502 = vshrl.u32 %v1501, 7
        %v1503 = vsub.s32 %v1500, %v1502
        %v1504 = vrot.slane %v1496, %v1503
        %v1506 = vunpack.c.l.s4 1983009808
        %v1507 = vunpack.c.0.s8 %v1506
        %v1508 = vlaneseq
        %v1509 = vshrl.u32 %v1508, 7
        %v1510 = vsub.s32 %v1507, %v1509
        %v1511 = vrot.slane %v1497, %v1510
        %v1512 = vcombine.low %v1399, %v1491
        %v1513 = vcombine.high %v1399, %v1491
        %v1515 = vunpack.c.l.s4 1983009808
        %v1516 = vunpack.c.0.s8 %v1515
        %v1517 = vlaneseq
        %v1518 = vshrl.u32 %v1517, 7
        %v1519 = vsub.s32 %v1516, %v1518
        %v1520 = vrot.slane %v1512, %v1519
        %v1522 = vunpack.c.l.s4 1983009808
        %v1523 = vunpack.c.0.s8 %v1522
        %v1524 = vlaneseq
        %v1525 = vshrl.u32 %v1524, 7
        %v1526 = vsub.s32 %v1523, %v1525
        %v1527 = vrot.slane %v1513, %v1526
        %v1528 = vcombine.low %v1504, %v1520
        %v1529 = vcombine.high %v1504, %v1520
        %v1531 = vunpack.c.l.s4 1934713408
        %v1532 = vunpack.c.0.s8 %v1531
        %v1533 = vlaneseq
        %v1534 = vshrl.u32 %v1533, 7
        %v1535 = vsub.s32 %v1532, %v1534
        %v1536 = vrot.slane %v1528, %v1535
        %v1538 = vunpack.c.l.s4 1934713408
        %v1539 = vunpack.c.0.s8 %v1538
        %v1540 = vlaneseq
        %v1541 = vshrl.u32 %v1540, 7
        %v1542 = vsub.s32 %v1539, %v1541
        %v1543 = vrot.slane %v1529, %v1542
        %v1544 = vcombine.low %v1511, %v1527
        %v1545 = vcombine.high %v1511, %v1527
        %v1547 = vunpack.c.l.s4 1934713408
        %v1548 = vunpack.c.0.s8 %v1547
        %v1549 = vlaneseq
        %v1550 = vshrl.u32 %v1549, 7
        %v1551 = vsub.s32 %v1548, %v1550
        %v1552 = vrot.slane %v1544, %v1551
        %v1554 = vunpack.c.l.s4 1934713408
        %v1555 = vunpack.c.0.s8 %v1554
        %v1556 = vlaneseq
        %v1557 = vshrl.u32 %v1556, 7
        %v1558 = vsub.s32 %v1555, %v1557
        %v1559 = vrot.slane %v1545, %v1558
        %v1560 = vcombine.high %v1536, 0.0
        %v1561 = vcombine.high %v1543, 0.0
        %v1562 = vcombine.high %v1552, 0.0
        %v1563 = vcombine.high %v1559, 0.0
        %v1564 = vcombine.low %v1536, %v1543
        %v1566 = vunpack.c.l.s4 1983009808
        %v1567 = vunpack.c.0.s8 %v1566
        %v1568 = vlaneseq
        %v1569 = vshrl.u32 %v1568, 7
        %v1570 = vsub.s32 %v1567, %v1569
        %v1571 = vrot.slane %v1564, %v1570
        %v1572 = vcombine.low %v1560, %v1561
        %v1574 = vunpack.c.l.s4 1983009808
        %v1575 = vunpack.c.0.s8 %v1574
        %v1576 = vlaneseq
        %v1577 = vshrl.u32 %v1576, 7
        %v1578 = vsub.s32 %v1575, %v1577
        %v1579 = vrot.slane %v1572, %v1578
        %v1580 = vcombine.low %v1552, %v1559
        %v1582 = vunpack.c.l.s4 1983009808
        %v1583 = vunpack.c.0.s8 %v1582
        %v1584 = vlaneseq
        %v1585 = vshrl.u32 %v1584, 7
        %v1586 = vsub.s32 %v1583, %v1585
        %v1587 = vrot.slane %v1580, %v1586
        %v1588 = vcombine.low %v1562, %v1563
        %v1590 = vunpack.c.l.s4 1983009808
        %v1591 = vunpack.c.0.s8 %v1590
        %v1592 = vlaneseq
        %v1593 = vshrl.u32 %v1592, 7
        %v1594 = vsub.s32 %v1591, %v1593
        %v1595 = vrot.slane %v1588, %v1594
        %v1596 = vcombine.low %v1571, %v1579
        %v1597 = vcombine.high %v1571, %v1579
        %v1599 = vunpack.c.l.s4 1934713408
        %v1600 = vunpack.c.0.s8 %v1599
        %v1601 = vlaneseq
        %v1602 = vshrl.u32 %v1601, 7
        %v1603 = vsub.s32 %v1600, %v1602
        %v1604 = vrot.slane %v1596, %v1603
        %v1606 = vunpack.c.l.s4 1934713408
        %v1607 = vunpack.c.0.s8 %v1606
        %v1608 = vlaneseq
        %v1609 = vshrl.u32 %v1608, 7
        %v1610 = vsub.s32 %v1607, %v1609
        %v1611 = vrot.slane %v1597, %v1610
        %v1612 = vcombine.low %v1587, %v1595
        %v1613 = vcombine.high %v1587, %v1595
        %v1615 = vunpack.c.l.s4 1934713408
        %v1616 = vunpack.c.0.s8 %v1615
        %v1617 = vlaneseq
        %v1618 = vshrl.u32 %v1617, 7
        %v1619 = vsub.s32 %v1616, %v1618
        %v1620 = vrot.slane %v1612, %v1619
        %v1622 = vunpack.c.l.s4 1934713408
        %v1623 = vunpack.c.0.s8 %v1622
        %v1624 = vlaneseq
        %v1625 = vshrl.u32 %v1624, 7
        %v1626 = vsub.s32 %v1623, %v1625
        %v1627 = vrot.slane %v1613, %v1626
        %v1628 = vcombine.low %v1604, %v1620
        %v1629 = vcombine.high %v1604, %v1620
        %v1630 = vcombine.low %v1611, %v1627
        %v1631 = vcombine.high %v1611, %v1627
        %1633 = vrot.lane.b32.xlu0 %v1629, 8
        %v1634 = vpop.permute.xlu0 %1633
        %1637 = vrot.lane.b32.xlu0 %v1630, 16
        %v1638 = vpop.permute.xlu0 %1637
        %1641 = vrot.lane.b32.xlu0 %v1631, 24
        %v1642 = vpop.permute.xlu0 %1641
        %v1644 = vsel %vm1078, %v1628, %v1634
        %vm1645 = vcmask 130048
        %v1646 = vsel %vm1645, %v1644, %v1638
        %vm1647 = vcmask 195584
        %v1648 = vsel %vm1647, %v1646, %v1642
        %v1649 = vpack.c.bf16 %v1648, %v1648
        %v1650 = vld [vmem:[%s5] sm:$0xf]
        %v1651 = vld [vmem:[%s5 + $0x4] sm:$0xf]
        %v1652 = vld [vmem:[%s5 + $0x8] sm:$0xf]
        %v1653 = vld [vmem:[%s5 + $0xc] sm:$0xf]
        %v1654 = vld [vmem:[%s6] sm:$0x1]
        %v1656 = vlaneseq
        %v1657 = vshrl.u32 %v1656, 7
        %v1658 = vsub.s32 0, %v1657
        %v1659 = vrot.slane %v1654, %v1658
        %v1665 = vunpack.c.l.b16 %v1650
        %v1666 = vunpack.c.l.b16 %v1651
        %v1667 = vunpack.c.l.b16 %v1652
        %v1668 = vunpack.c.l.b16 %v1653
        %v1669 = vpack.c.b16 %v1666, %v1665
        %v1670 = vpack.c.b16 %v1668, %v1667
        %v1674 = vsel %vm584, %v1649, 0
        %1676 = vmatprep.subr.bf16.mxu0 0
        %1677 = vmatpush1.bf16.msra.mxu0 %v1669
        %1678 = vmatprep.subr.bf16.mxu0 0
        %1679 = vmatpush1.bf16.msra.mxu0 %v1670
        %1680 = vmatprep.subr.bf16.mxu0 0
        %1681 = vmatpush1.bf16.msra.mxu0 0
        %1682 = vmatprep.subr.bf16.mxu0 0
        %1683 = vmatpush1.bf16.msra.mxu0 0
        %1684 = vmatprep.subr.bf16.mxu0 0
        %1685 = vmatpush1.bf16.msra.mxu0 0
        %1686 = vmatprep.subr.bf16.mxu0 0
        %1687 = vmatpush1.bf16.msra.mxu0 0
        %1688 = vmatprep.subr.bf16.mxu0 0
        %1689 = vmatpush1.bf16.msra.mxu0 0
        %1690 = vmatprep.subr.bf16.mxu0 0
        %1691 = vmatpush1.bf16.msra.mxu0 0
        %1692 = vmatprep.subr.bf16.mxu0 0
        %1693 = vmatpush1.bf16.msra.mxu0 0
        %1694 = vmatprep.subr.bf16.mxu0 0
        %1695 = vmatpush1.bf16.msra.mxu0 0
        %1696 = vmatprep.subr.bf16.mxu0 0
        %1697 = vmatpush1.bf16.msra.mxu0 0
        %1698 = vmatprep.subr.bf16.mxu0 0
        %1699 = vmatpush1.bf16.msra.mxu0 0
        %1700 = vmatprep.subr.bf16.mxu0 0
        %1701 = vmatpush1.bf16.msra.mxu0 0
        %1702 = vmatprep.subr.bf16.mxu0 0
        %1703 = vmatpush1.bf16.msra.mxu0 0
        %1704 = vmatprep.subr.bf16.mxu0 0
        %1705 = vmatpush1.bf16.msra.mxu0 0
        %1706 = vmatprep.subr.bf16.mxu0 0
        %1707 = vmatpush1.bf16.msra.mxu0 0
        %1708 = vmatprep.mubr.bf16.mxu0 0
        %1709 = vmatmul.mubr.bf16.gmra.mrb[0].mxu0 %v1674
        %v1710 = vpop.f32.mrb[0].mxu0
        %v1711 = vadd.f32 %v1659, %v1710
        %v1712 = vpop.f32.mrb[0].mxu0
        %v1713 = vpop.f32.mrb[0].mxu0
        %v1714 = vpop.f32.mrb[0].mxu0
        %1715 = vdwg.mxu0
        %1716 = vst.msk [vmem:[%s410] sm:$0xff] %vm584, %v1711
        %s1717 = sand.u32 %s214, 1
        %s1718 = scalar_lea.sflag [#allocation6], %s1717
        %s1719 = sand.u32 %s214, 1
        %s1720 = smul.addr %s1719, 8
        %s1721 = scalar_lea.vmem [#allocation13], %s1720
        // Predicated region
        $region73: #{tpu_custom_call.1} parent=47 // pred_check
          %p1722 = pneg %p224
        $region74: #{tpu_custom_call.1} parent=47 // pred_check_branch
          %1724 = sbr.rel (%p1722) target = $region76
        $region75: #{tpu_custom_call.1} parent=47 // pred_region
          %s1726 = ssub.s32 128, 128
          %1727 = vsyncadd %s1718, %s1726
          %s1728 = sadd.s32 %s33, %s32
          %s1729 = smul.addr %s1728, 128
          %s1730 = scalar_lea.hbm %s7, %s1729
          %s1732 = sshll.u32 %s1721, 4
          %s1733 = int_to_ptr.vmem [resolvable:$true] %s1732
          %1735 = dma.vmem_to_hbm [thread:$0]  %s1733, 128, %s1730, %s1718
        $region76: #{tpu_custom_call.1} parent=47 // pred_fallthru
          _
      $region48: #{tpu_custom_call.1} parent=5 // pred_fallthru
        _
      %p1736 = scmp.le.s32.totalorder 2, %s23
      // Predicated region
      $region77: #{tpu_custom_call.1} parent=5 // pred_check
        %p1737 = pneg %p1736
      $region78: #{tpu_custom_call.1} parent=5 // pred_check_branch
        %1739 = sbr.rel (%p1737) target = $region80
      $region79: #{tpu_custom_call.1} parent=5 // pred_region
        %s1740 = ssub.s32 %s23, 2
        // Predicated region
        $region81: #{tpu_custom_call.1} parent=79 // pred_check
          %p1741 = pneg %p230
        $region82: #{tpu_custom_call.1} parent=79 // pred_check_branch
          %1743 = sbr.rel (%p1741) target = $region84
        $region83: #{tpu_custom_call.1} parent=79 // pred_region
          %s1744 = sand.u32 %s215, 1
          %s1745 = scalar_lea.sflag [#allocation6], %s1744
          %s1746 = sand.u32 %s215, 1
          %s1747 = smul.addr %s1746, 8
          %s1748 = scalar_lea.vmem [#allocation13], %s1747
          %1749 = dma.done %s1745, 128
        $region84: #{tpu_custom_call.1} parent=79 // pred_fallthru
          _
      $region80: #{tpu_custom_call.1} parent=5 // pred_fallthru
        _
    $region6: #{tpu_custom_call.1} parent=1 // loop_footer
      %s27 = sadd.s32 1, %s23
    $region7: #{tpu_custom_call.1} parent=1 // loop_footer_branch
      %22 = sbr.rel target = $region3
    $region8: #{tpu_custom_call.1} parent=1 // loop_exit
      _
    %1750 = vsyncpa [#allocation5], 1
    %s1751 = scalar_lea.sflag [#allocation5], 1
    %1752 = vsyncpa %s1751, 1
    %1753 = vsyncpa [#allocation8], 1
    %s1754 = scalar_lea.sflag [#allocation8], 1
    %1755 = vsyncpa %s1754, 1
    %1756 = vsyncpa [#allocation11], 1
    %1757 = vsyncpa [#allocation6], 1
    %s1758 = scalar_lea.sflag [#allocation6], 1
    %1759 = vsyncpa %s1758, 1

</llo_original>
